<compile_context>
chip_gen: v7x
topology: tpu7x:2x2x1
jax: 0.10.0
libtpu: 0.0.40
codegen_flags: <defaults>
</compile_context>

<pallas_src>
import jax
import jax.numpy as jnp
from jax.experimental import pallas as pl
from jax.experimental.pallas import tpu as pltpu

D = 4            # generalized-coordinate dimension
DU = 2           # control dimension
B = 16           # batch
LANE = 128       # batch tile on the lane axis
DT = jnp.float32

# flat offsets into the packed parameter vector (lives in SMEM inside the kernel)
_OFF_M0 = 0                   # M0[i*D + j]
_OFF_C = _OFF_M0 + D * D      # C[(i*D + j)*D + k]
_OFF_G = _OFF_C + D * D * D   # g[i]
_OFF_K = _OFF_G + D           # K[i*D + j]
_OFF_BU = _OFF_K + D * D      # Bu[a*D + i]
_OFF_DMP = _OFF_BU + DU * D   # damp[i]
NPARAMS = _OFF_DMP + D


def _rigid_body_kernel(p_ref, q_ref, v_ref, u_ref, vdot_ref):
    """Batch-on-lanes Euler-Lagrange solve. q/v: (D, LANE), u: (DU, LANE)."""
    q = q_ref[...]
    v = v_ref[...]
    u = u_ref[...]
    cosq = jnp.cos(q)
    sinq = jnp.sin(q)

    # per-coordinate (1, LANE) rows, fully unrolled in Python (D = 4, DU = 2)
    qr = [q[i:i + 1, :] for i in range(D)]
    vr = [v[i:i + 1, :] for i in range(D)]
    ur = [u[a:a + 1, :] for a in range(DU)]
    cq = [cosq[i:i + 1, :] for i in range(D)]
    sq = [sinq[i:i + 1, :] for i in range(D)]

    p = p_ref  # scalar reads from SMEM

    # ---- mass matrix: M_ij = M0_ij + sum_k C_ijk cos q_k   (each entry (1, LANE))
    M = [[None] * D for _ in range(D)]
    for i in range(D):
        for j in range(D):
            acc = p[_OFF_C + (i * D + j) * D] * cq[0]
            for k in range(1, D):
                acc = acc + p[_OFF_C + (i * D + j) * D + k] * cq[k]
            M[i][j] = acc + p[_OFF_M0 + i * D + j]

    # ---- Coriolis force (dM_ij/dq_k = -C_ijk sin q_k):
    #   Cv_i = sum_jk dM_ij/dq_k v_j v_k - 0.5 sum_jk dM_jk/dq_i v_j v_k
    vs = [vr[k] * sq[k] for k in range(D)]
    vv = [[vr[j] * vr[k] for k in range(D)] for j in range(D)]
    vvs = [[vr[j] * vs[k] for k in range(D)] for j in range(D)]
    Cv = [None] * D
    for i in range(D):
        t1 = None   # sum_jk C_ijk v_j v_k sin q_k
        t2 = None   # sum_jk C_jki v_j v_k
        for j in range(D):
            for k in range(D):
                a1 = p[_OFF_C + (i * D + j) * D + k] * vvs[j][k]
                a2 = p[_OFF_C + (j * D + k) * D + i] * vv[j][k]
                t1 = a1 if t1 is None else t1 + a1
                t2 = a2 if t2 is None else t2 + a2
        Cv[i] = -t1 + 0.5 * sq[i] * t2

    # ---- gradient of potential: G_i = g_i sin q_i + (K q)_i
    G = []
    for i in range(D):
        gi = p[_OFF_G + i] * sq[i]
        for j in range(D):
            gi = gi + p[_OFF_K + i * D + j] * qr[j]
        G.append(gi)

    # ---- generalized force F_i = sum_a Bu_ai u_a - damp_i v_i ; rhs = F - Cv - G
    rhs = []
    for i in range(D):
        fi = p[_OFF_BU + i] * ur[0]
        for a in range(1, DU):
            fi = fi + p[_OFF_BU + a * D + i] * ur[a]
        fi = fi - p[_OFF_DMP + i] * vr[i]
        rhs.append(fi - Cv[i] - G[i])

    # ---- batched Gauss-Jordan solve M x = rhs (unrolled, no pivoting:
    #      M is strongly diagonally dominant by construction). Pure VPU/EUP.
    A = M
    b = rhs
    for k in range(D):
        piv = A[k][k]
        inv = pl.reciprocal(piv, approx=True)      # EUP seed
        inv = inv * (2.0 - piv * inv)              # Newton step 1
        inv = inv * (2.0 - piv * inv)              # Newton step 2 (~f32 exact)
        rowk = [A[k][j] * inv for j in range(D)]
        bk = b[k] * inv
        for i in range(D):
            if i == k:
                continue
            fac = A[i][k]
            A[i] = [A[i][j] - fac * rowk[j] for j in range(D)]
            b[i] = b[i] - fac * bk
        A[k] = rowk
        b[k] = bk

    # lane-dense output store: (D, LANE), last dim 128-wide
    for i in range(D):
        vdot_ref[i:i + 1, :] = b[i]


def make_params(key):
    ks = jax.random.split(key, 6)
    S = jax.random.normal(ks[0], (D, D), DT)
    M0 = 2.0 * jnp.eye(D, dtype=DT) + 0.1 * (S + S.T)
    R = 0.1 * jax.random.normal(ks[1], (D, D, D), DT)
    C = 0.5 * (R + jnp.transpose(R, (1, 0, 2)))          # symmetric in (i, j)
    g = jax.random.normal(ks[2], (D,), DT)
    K0 = jax.random.normal(ks[3], (D, D), DT)
    K = 0.5 * (K0 + K0.T)
    Bu = jax.random.normal(ks[4], (DU, D), DT)
    damp = 0.1 * jnp.abs(jax.random.normal(ks[5], (D,), DT))
    return dict(M0=M0, C=C, g=g, K=K, Bu=Bu, damp=damp)


def pack_params(p):
    """Pack all model parameters once into one flat f32 slab (kernel SMEM input)."""
    return jnp.concatenate([
        p["M0"].reshape(-1), p["C"].reshape(-1), p["g"].reshape(-1),
        p["K"].reshape(-1), p["Bu"].reshape(-1), p["damp"].reshape(-1),
    ]).astype(DT)


def rigid_body_forward(t, y, u, packed_params):
    """Mirrors RigidBodyModule.forward(t, (q, v), u) -> (qdot, vdot)."""
    del t
    q, v = y
    n = q.shape[0]
    if u is None:
        u = jnp.zeros((n, DU), DT)

    # batch on the lane axis, padded up to a multiple of 128
    npad = pl.cdiv(n, LANE) * LANE
    pad = lambda x: jnp.pad(x.astype(DT).T, ((0, 0), (0, npad - n)))
    qT, vT, uT = pad(q), pad(v), pad(u)

    data = lambda rows: pl.BlockSpec((rows, LANE), lambda i: (0, i))
    vdotT = pl.pallas_call(
        _rigid_body_kernel,
        out_shape=jax.ShapeDtypeStruct((D, npad), DT),
        grid=(npad // LANE,),
        in_specs=[pl.BlockSpec(memory_space=pltpu.MemorySpace.SMEM),  # params slab
                  data(D), data(D), data(DU)],
        out_specs=data(D),
        compiler_params=pltpu.CompilerParams(
            dimension_semantics=("parallel",)),
    )(packed_params, qT, vT, uT)

    qdot = v                      # kinematics: qdot = v (pass-through, no kernel output)
    vdot = vdotT[:, :n].T
    return qdot, vdot


if __name__ == "__main__":
    key = jax.random.PRNGKey(0)
    kp, kq, kv, ku = jax.random.split(key, 4)
    params = make_params(kp)
    packed = pack_params(params)          # packed once, outside the forward call
    q = jax.random.normal(kq, (B, D), DT)
    v = jax.random.normal(kv, (B, D), DT)
    u = jax.random.normal(ku, (B, DU), DT)

    qdot, vdot = rigid_body_forward(0.0, (q, v), u, packed)
    jax.block_until_ready((qdot, vdot))

    # Pure-JAX reference (autodiff derivatives + dense solve), per sample.
    M0, C, g, K, Bu, damp = (params[n] for n in ("M0", "C", "g", "K", "Bu", "damp"))

    def mass_single(q1):
        return M0 + jnp.einsum('ijk,k->ij', C, jnp.cos(q1))

    def pot_single(q1):
        return jnp.sum(g * (1.0 - jnp.cos(q1))) + 0.5 * q1 @ (K @ q1)

    def qddot_single(q1, v1, u1):
        Mq = mass_single(q1)
        dM = jax.jacfwd(mass_single)(q1)                 # dM[i,j,k] = dM_ij/dq_k
        Cv = (jnp.einsum('ijk,j,k->i', dM, v1, v1)
              - 0.5 * jnp.einsum('jki,j,k->i', dM, v1, v1))
        G = jax.grad(pot_single)(q1)
        F = u1 @ Bu - damp * v1
        return jnp.linalg.solve(Mq, F - Cv - G)

    ref_vdot = jax.vmap(qddot_single)(q, v, u)
    assert jnp.allclose(qdot, v, atol=1e-6)
    assert jnp.allclose(vdot, ref_vdot, atol=2e-3, rtol=2e-3), \
        float(jnp.max(jnp.abs(vdot - ref_vdot)))
    print("KERNEL_OK")
</pallas_src>

<mosaic_0001>
module attributes {stable_mosaic.version = 11 : i64} {
  func.func @_rigid_body_kernel(%arg0: i32, %arg1: memref<112xf32, #tpu.memory_space<smem>>, %arg2: memref<4x128xf32, #tpu.memory_space<vmem>>, %arg3: memref<4x128xf32, #tpu.memory_space<vmem>>, %arg4: memref<2x128xf32, #tpu.memory_space<vmem>>, %arg5: memref<4x128xf32, #tpu.memory_space<vmem>>) attributes {dimension_semantics = [#tpu.dimension_semantics<parallel>], iteration_bounds = array<i64: 1>, scalar_prefetch = 0 : i64, scratch_operands = 0 : i64, tpu.core_type = #tpu.core_type<tc>, window_params = [{transform_indices = @transform_0, window_bounds = array<i64: 112>}, {transform_indices = @transform_1, window_bounds = array<i64: 4, 128>}, {transform_indices = @transform_2, window_bounds = array<i64: 4, 128>}, {transform_indices = @transform_3, window_bounds = array<i64: 2, 128>}, {transform_indices = @transform_4, window_bounds = array<i64: 4, 128>}]} {
    %c0 = arith.constant 0 : index
    %c0_0 = arith.constant 0 : index
    %0 = vector.load %arg2[%c0, %c0_0] : memref<4x128xf32, #tpu.memory_space<vmem>>, vector<4x128xf32>
    %c0_1 = arith.constant 0 : index
    %c0_2 = arith.constant 0 : index
    %1 = vector.load %arg3[%c0_1, %c0_2] : memref<4x128xf32, #tpu.memory_space<vmem>>, vector<4x128xf32>
    %c0_3 = arith.constant 0 : index
    %c0_4 = arith.constant 0 : index
    %2 = vector.load %arg4[%c0_3, %c0_4] : memref<2x128xf32, #tpu.memory_space<vmem>>, vector<2x128xf32>
    %3 = math.cos %0 : vector<4x128xf32>
    %4 = math.sin %0 : vector<4x128xf32>
    %5 = vector.extract_strided_slice %0 {offsets = [0, 0], sizes = [1, 128], strides = [1, 1]} : vector<4x128xf32> to vector<1x128xf32>
    %6 = vector.extract_strided_slice %0 {offsets = [1, 0], sizes = [1, 128], strides = [1, 1]} : vector<4x128xf32> to vector<1x128xf32>
    %7 = vector.extract_strided_slice %0 {offsets = [2, 0], sizes = [1, 128], strides = [1, 1]} : vector<4x128xf32> to vector<1x128xf32>
    %8 = vector.extract_strided_slice %0 {offsets = [3, 0], sizes = [1, 128], strides = [1, 1]} : vector<4x128xf32> to vector<1x128xf32>
    %9 = vector.extract_strided_slice %1 {offsets = [0, 0], sizes = [1, 128], strides = [1, 1]} : vector<4x128xf32> to vector<1x128xf32>
    %10 = vector.extract_strided_slice %1 {offsets = [1, 0], sizes = [1, 128], strides = [1, 1]} : vector<4x128xf32> to vector<1x128xf32>
    %11 = vector.extract_strided_slice %1 {offsets = [2, 0], sizes = [1, 128], strides = [1, 1]} : vector<4x128xf32> to vector<1x128xf32>
    %12 = vector.extract_strided_slice %1 {offsets = [3, 0], sizes = [1, 128], strides = [1, 1]} : vector<4x128xf32> to vector<1x128xf32>
    %13 = vector.extract_strided_slice %2 {offsets = [0, 0], sizes = [1, 128], strides = [1, 1]} : vector<2x128xf32> to vector<1x128xf32>
    %14 = vector.extract_strided_slice %2 {offsets = [1, 0], sizes = [1, 128], strides = [1, 1]} : vector<2x128xf32> to vector<1x128xf32>
    %15 = vector.extract_strided_slice %3 {offsets = [0, 0], sizes = [1, 128], strides = [1, 1]} : vector<4x128xf32> to vector<1x128xf32>
    %16 = vector.extract_strided_slice %3 {offsets = [1, 0], sizes = [1, 128], strides = [1, 1]} : vector<4x128xf32> to vector<1x128xf32>
    %17 = vector.extract_strided_slice %3 {offsets = [2, 0], sizes = [1, 128], strides = [1, 1]} : vector<4x128xf32> to vector<1x128xf32>
    %18 = vector.extract_strided_slice %3 {offsets = [3, 0], sizes = [1, 128], strides = [1, 1]} : vector<4x128xf32> to vector<1x128xf32>
    %19 = vector.extract_strided_slice %4 {offsets = [0, 0], sizes = [1, 128], strides = [1, 1]} : vector<4x128xf32> to vector<1x128xf32>
    %20 = vector.extract_strided_slice %4 {offsets = [1, 0], sizes = [1, 128], strides = [1, 1]} : vector<4x128xf32> to vector<1x128xf32>
    %21 = vector.extract_strided_slice %4 {offsets = [2, 0], sizes = [1, 128], strides = [1, 1]} : vector<4x128xf32> to vector<1x128xf32>
    %22 = vector.extract_strided_slice %4 {offsets = [3, 0], sizes = [1, 128], strides = [1, 1]} : vector<4x128xf32> to vector<1x128xf32>
    %c16 = arith.constant 16 : index
    %23 = memref.load %arg1[%c16] : memref<112xf32, #tpu.memory_space<smem>>
    %24 = vector.broadcast %23 : f32 to vector<1x128xf32>
    %25 = arith.mulf %24, %15 : vector<1x128xf32>
    %c17 = arith.constant 17 : index
    %26 = memref.load %arg1[%c17] : memref<112xf32, #tpu.memory_space<smem>>
    %27 = vector.broadcast %26 : f32 to vector<1x128xf32>
    %28 = arith.mulf %27, %16 : vector<1x128xf32>
    %29 = arith.addf %25, %28 : vector<1x128xf32>
    %c18 = arith.constant 18 : index
    %30 = memref.load %arg1[%c18] : memref<112xf32, #tpu.memory_space<smem>>
    %31 = vector.broadcast %30 : f32 to vector<1x128xf32>
    %32 = arith.mulf %31, %17 : vector<1x128xf32>
    %33 = arith.addf %29, %32 : vector<1x128xf32>
    %c19 = arith.constant 19 : index
    %34 = memref.load %arg1[%c19] : memref<112xf32, #tpu.memory_space<smem>>
    %35 = vector.broadcast %34 : f32 to vector<1x128xf32>
    %36 = arith.mulf %35, %18 : vector<1x128xf32>
    %37 = arith.addf %33, %36 : vector<1x128xf32>
    %c0_5 = arith.constant 0 : index
    %38 = memref.load %arg1[%c0_5] : memref<112xf32, #tpu.memory_space<smem>>
    %39 = vector.broadcast %38 : f32 to vector<1x128xf32>
    %40 = arith.addf %37, %39 : vector<1x128xf32>
    %c20 = arith.constant 20 : index
    %41 = memref.load %arg1[%c20] : memref<112xf32, #tpu.memory_space<smem>>
    %42 = vector.broadcast %41 : f32 to vector<1x128xf32>
    %43 = arith.mulf %42, %15 : vector<1x128xf32>
    %c21 = arith.constant 21 : index
    %44 = memref.load %arg1[%c21] : memref<112xf32, #tpu.memory_space<smem>>
    %45 = vector.broadcast %44 : f32 to vector<1x128xf32>
    %46 = arith.mulf %45, %16 : vector<1x128xf32>
    %47 = arith.addf %43, %46 : vector<1x128xf32>
    %c22 = arith.constant 22 : index
    %48 = memref.load %arg1[%c22] : memref<112xf32, #tpu.memory_space<smem>>
    %49 = vector.broadcast %48 : f32 to vector<1x128xf32>
    %50 = arith.mulf %49, %17 : vector<1x128xf32>
    %51 = arith.addf %47, %50 : vector<1x128xf32>
    %c23 = arith.constant 23 : index
    %52 = memref.load %arg1[%c23] : memref<112xf32, #tpu.memory_space<smem>>
    %53 = vector.broadcast %52 : f32 to vector<1x128xf32>
    %54 = arith.mulf %53, %18 : vector<1x128xf32>
    %55 = arith.addf %51, %54 : vector<1x128xf32>
    %c1 = arith.constant 1 : index
    %56 = memref.load %arg1[%c1] : memref<112xf32, #tpu.memory_space<smem>>
    %57 = vector.broadcast %56 : f32 to vector<1x128xf32>
    %58 = arith.addf %55, %57 : vector<1x128xf32>
    %c24 = arith.constant 24 : index
    %59 = memref.load %arg1[%c24] : memref<112xf32, #tpu.memory_space<smem>>
    %60 = vector.broadcast %59 : f32 to vector<1x128xf32>
    %61 = arith.mulf %60, %15 : vector<1x128xf32>
    %c25 = arith.constant 25 : index
    %62 = memref.load %arg1[%c25] : memref<112xf32, #tpu.memory_space<smem>>
    %63 = vector.broadcast %62 : f32 to vector<1x128xf32>
    %64 = arith.mulf %63, %16 : vector<1x128xf32>
    %65 = arith.addf %61, %64 : vector<1x128xf32>
    %c26 = arith.constant 26 : index
    %66 = memref.load %arg1[%c26] : memref<112xf32, #tpu.memory_space<smem>>
    %67 = vector.broadcast %66 : f32 to vector<1x128xf32>
    %68 = arith.mulf %67, %17 : vector<1x128xf32>
    %69 = arith.addf %65, %68 : vector<1x128xf32>
    %c27 = arith.constant 27 : index
    %70 = memref.load %arg1[%c27] : memref<112xf32, #tpu.memory_space<smem>>
    %71 = vector.broadcast %70 : f32 to vector<1x128xf32>
    %72 = arith.mulf %71, %18 : vector<1x128xf32>
    %73 = arith.addf %69, %72 : vector<1x128xf32>
    %c2 = arith.constant 2 : index
    %74 = memref.load %arg1[%c2] : memref<112xf32, #tpu.memory_space<smem>>
    %75 = vector.broadcast %74 : f32 to vector<1x128xf32>
    %76 = arith.addf %73, %75 : vector<1x128xf32>
    %c28 = arith.constant 28 : index
    %77 = memref.load %arg1[%c28] : memref<112xf32, #tpu.memory_space<smem>>
    %78 = vector.broadcast %77 : f32 to vector<1x128xf32>
    %79 = arith.mulf %78, %15 : vector<1x128xf32>
    %c29 = arith.constant 29 : index
    %80 = memref.load %arg1[%c29] : memref<112xf32, #tpu.memory_space<smem>>
    %81 = vector.broadcast %80 : f32 to vector<1x128xf32>
    %82 = arith.mulf %81, %16 : vector<1x128xf32>
    %83 = arith.addf %79, %82 : vector<1x128xf32>
    %c30 = arith.constant 30 : index
    %84 = memref.load %arg1[%c30] : memref<112xf32, #tpu.memory_space<smem>>
    %85 = vector.broadcast %84 : f32 to vector<1x128xf32>
    %86 = arith.mulf %85, %17 : vector<1x128xf32>
    %87 = arith.addf %83, %86 : vector<1x128xf32>
    %c31 = arith.constant 31 : index
    %88 = memref.load %arg1[%c31] : memref<112xf32, #tpu.memory_space<smem>>
    %89 = vector.broadcast %88 : f32 to vector<1x128xf32>
    %90 = arith.mulf %89, %18 : vector<1x128xf32>
    %91 = arith.addf %87, %90 : vector<1x128xf32>
    %c3 = arith.constant 3 : index
    %92 = memref.load %arg1[%c3] : memref<112xf32, #tpu.memory_space<smem>>
    %93 = vector.broadcast %92 : f32 to vector<1x128xf32>
    %94 = arith.addf %91, %93 : vector<1x128xf32>
    %c32 = arith.constant 32 : index
    %95 = memref.load %arg1[%c32] : memref<112xf32, #tpu.memory_space<smem>>
    %96 = vector.broadcast %95 : f32 to vector<1x128xf32>
    %97 = arith.mulf %96, %15 : vector<1x128xf32>
    %c33 = arith.constant 33 : index
    %98 = memref.load %arg1[%c33] : memref<112xf32, #tpu.memory_space<smem>>
    %99 = vector.broadcast %98 : f32 to vector<1x128xf32>
    %100 = arith.mulf %99, %16 : vector<1x128xf32>
    %101 = arith.addf %97, %100 : vector<1x128xf32>
    %c34 = arith.constant 34 : index
    %102 = memref.load %arg1[%c34] : memref<112xf32, #tpu.memory_space<smem>>
    %103 = vector.broadcast %102 : f32 to vector<1x128xf32>
    %104 = arith.mulf %103, %17 : vector<1x128xf32>
    %105 = arith.addf %101, %104 : vector<1x128xf32>
    %c35 = arith.constant 35 : index
    %106 = memref.load %arg1[%c35] : memref<112xf32, #tpu.memory_space<smem>>
    %107 = vector.broadcast %106 : f32 to vector<1x128xf32>
    %108 = arith.mulf %107, %18 : vector<1x128xf32>
    %109 = arith.addf %105, %108 : vector<1x128xf32>
    %c4 = arith.constant 4 : index
    %110 = memref.load %arg1[%c4] : memref<112xf32, #tpu.memory_space<smem>>
    %111 = vector.broadcast %110 : f32 to vector<1x128xf32>
    %112 = arith.addf %109, %111 : vector<1x128xf32>
    %c36 = arith.constant 36 : index
    %113 = memref.load %arg1[%c36] : memref<112xf32, #tpu.memory_space<smem>>
    %114 = vector.broadcast %113 : f32 to vector<1x128xf32>
    %115 = arith.mulf %114, %15 : vector<1x128xf32>
    %c37 = arith.constant 37 : index
    %116 = memref.load %arg1[%c37] : memref<112xf32, #tpu.memory_space<smem>>
    %117 = vector.broadcast %116 : f32 to vector<1x128xf32>
    %118 = arith.mulf %117, %16 : vector<1x128xf32>
    %119 = arith.addf %115, %118 : vector<1x128xf32>
    %c38 = arith.constant 38 : index
    %120 = memref.load %arg1[%c38] : memref<112xf32, #tpu.memory_space<smem>>
    %121 = vector.broadcast %120 : f32 to vector<1x128xf32>
    %122 = arith.mulf %121, %17 : vector<1x128xf32>
    %123 = arith.addf %119, %122 : vector<1x128xf32>
    %c39 = arith.constant 39 : index
    %124 = memref.load %arg1[%c39] : memref<112xf32, #tpu.memory_space<smem>>
    %125 = vector.broadcast %124 : f32 to vector<1x128xf32>
    %126 = arith.mulf %125, %18 : vector<1x128xf32>
    %127 = arith.addf %123, %126 : vector<1x128xf32>
    %c5 = arith.constant 5 : index
    %128 = memref.load %arg1[%c5] : memref<112xf32, #tpu.memory_space<smem>>
    %129 = vector.broadcast %128 : f32 to vector<1x128xf32>
    %130 = arith.addf %127, %129 : vector<1x128xf32>
    %c40 = arith.constant 40 : index
    %131 = memref.load %arg1[%c40] : memref<112xf32, #tpu.memory_space<smem>>
    %132 = vector.broadcast %131 : f32 to vector<1x128xf32>
    %133 = arith.mulf %132, %15 : vector<1x128xf32>
    %c41 = arith.constant 41 : index
    %134 = memref.load %arg1[%c41] : memref<112xf32, #tpu.memory_space<smem>>
    %135 = vector.broadcast %134 : f32 to vector<1x128xf32>
    %136 = arith.mulf %135, %16 : vector<1x128xf32>
    %137 = arith.addf %133, %136 : vector<1x128xf32>
    %c42 = arith.constant 42 : index
    %138 = memref.load %arg1[%c42] : memref<112xf32, #tpu.memory_space<smem>>
    %139 = vector.broadcast %138 : f32 to vector<1x128xf32>
    %140 = arith.mulf %139, %17 : vector<1x128xf32>
    %141 = arith.addf %137, %140 : vector<1x128xf32>
    %c43 = arith.constant 43 : index
    %142 = memref.load %arg1[%c43] : memref<112xf32, #tpu.memory_space<smem>>
    %143 = vector.broadcast %142 : f32 to vector<1x128xf32>
    %144 = arith.mulf %143, %18 : vector<1x128xf32>
    %145 = arith.addf %141, %144 : vector<1x128xf32>
    %c6 = arith.constant 6 : index
    %146 = memref.load %arg1[%c6] : memref<112xf32, #tpu.memory_space<smem>>
    %147 = vector.broadcast %146 : f32 to vector<1x128xf32>
    %148 = arith.addf %145, %147 : vector<1x128xf32>
    %c44 = arith.constant 44 : index
    %149 = memref.load %arg1[%c44] : memref<112xf32, #tpu.memory_space<smem>>
    %150 = vector.broadcast %149 : f32 to vector<1x128xf32>
    %151 = arith.mulf %150, %15 : vector<1x128xf32>
    %c45 = arith.constant 45 : index
    %152 = memref.load %arg1[%c45] : memref<112xf32, #tpu.memory_space<smem>>
    %153 = vector.broadcast %152 : f32 to vector<1x128xf32>
    %154 = arith.mulf %153, %16 : vector<1x128xf32>
    %155 = arith.addf %151, %154 : vector<1x128xf32>
    %c46 = arith.constant 46 : index
    %156 = memref.load %arg1[%c46] : memref<112xf32, #tpu.memory_space<smem>>
    %157 = vector.broadcast %156 : f32 to vector<1x128xf32>
    %158 = arith.mulf %157, %17 : vector<1x128xf32>
    %159 = arith.addf %155, %158 : vector<1x128xf32>
    %c47 = arith.constant 47 : index
    %160 = memref.load %arg1[%c47] : memref<112xf32, #tpu.memory_space<smem>>
    %161 = vector.broadcast %160 : f32 to vector<1x128xf32>
    %162 = arith.mulf %161, %18 : vector<1x128xf32>
    %163 = arith.addf %159, %162 : vector<1x128xf32>
    %c7 = arith.constant 7 : index
    %164 = memref.load %arg1[%c7] : memref<112xf32, #tpu.memory_space<smem>>
    %165 = vector.broadcast %164 : f32 to vector<1x128xf32>
    %166 = arith.addf %163, %165 : vector<1x128xf32>
    %c48 = arith.constant 48 : index
    %167 = memref.load %arg1[%c48] : memref<112xf32, #tpu.memory_space<smem>>
    %168 = vector.broadcast %167 : f32 to vector<1x128xf32>
    %169 = arith.mulf %168, %15 : vector<1x128xf32>
    %c49 = arith.constant 49 : index
    %170 = memref.load %arg1[%c49] : memref<112xf32, #tpu.memory_space<smem>>
    %171 = vector.broadcast %170 : f32 to vector<1x128xf32>
    %172 = arith.mulf %171, %16 : vector<1x128xf32>
    %173 = arith.addf %169, %172 : vector<1x128xf32>
    %c50 = arith.constant 50 : index
    %174 = memref.load %arg1[%c50] : memref<112xf32, #tpu.memory_space<smem>>
    %175 = vector.broadcast %174 : f32 to vector<1x128xf32>
    %176 = arith.mulf %175, %17 : vector<1x128xf32>
    %177 = arith.addf %173, %176 : vector<1x128xf32>
    %c51 = arith.constant 51 : index
    %178 = memref.load %arg1[%c51] : memref<112xf32, #tpu.memory_space<smem>>
    %179 = vector.broadcast %178 : f32 to vector<1x128xf32>
    %180 = arith.mulf %179, %18 : vector<1x128xf32>
    %181 = arith.addf %177, %180 : vector<1x128xf32>
    %c8 = arith.constant 8 : index
    %182 = memref.load %arg1[%c8] : memref<112xf32, #tpu.memory_space<smem>>
    %183 = vector.broadcast %182 : f32 to vector<1x128xf32>
    %184 = arith.addf %181, %183 : vector<1x128xf32>
    %c52 = arith.constant 52 : index
    %185 = memref.load %arg1[%c52] : memref<112xf32, #tpu.memory_space<smem>>
    %186 = vector.broadcast %185 : f32 to vector<1x128xf32>
    %187 = arith.mulf %186, %15 : vector<1x128xf32>
    %c53 = arith.constant 53 : index
    %188 = memref.load %arg1[%c53] : memref<112xf32, #tpu.memory_space<smem>>
    %189 = vector.broadcast %188 : f32 to vector<1x128xf32>
    %190 = arith.mulf %189, %16 : vector<1x128xf32>
    %191 = arith.addf %187, %190 : vector<1x128xf32>
    %c54 = arith.constant 54 : index
    %192 = memref.load %arg1[%c54] : memref<112xf32, #tpu.memory_space<smem>>
    %193 = vector.broadcast %192 : f32 to vector<1x128xf32>
    %194 = arith.mulf %193, %17 : vector<1x128xf32>
    %195 = arith.addf %191, %194 : vector<1x128xf32>
    %c55 = arith.constant 55 : index
    %196 = memref.load %arg1[%c55] : memref<112xf32, #tpu.memory_space<smem>>
    %197 = vector.broadcast %196 : f32 to vector<1x128xf32>
    %198 = arith.mulf %197, %18 : vector<1x128xf32>
    %199 = arith.addf %195, %198 : vector<1x128xf32>
    %c9 = arith.constant 9 : index
    %200 = memref.load %arg1[%c9] : memref<112xf32, #tpu.memory_space<smem>>
    %201 = vector.broadcast %200 : f32 to vector<1x128xf32>
    %202 = arith.addf %199, %201 : vector<1x128xf32>
    %c56 = arith.constant 56 : index
    %203 = memref.load %arg1[%c56] : memref<112xf32, #tpu.memory_space<smem>>
    %204 = vector.broadcast %203 : f32 to vector<1x128xf32>
    %205 = arith.mulf %204, %15 : vector<1x128xf32>
    %c57 = arith.constant 57 : index
    %206 = memref.load %arg1[%c57] : memref<112xf32, #tpu.memory_space<smem>>
    %207 = vector.broadcast %206 : f32 to vector<1x128xf32>
    %208 = arith.mulf %207, %16 : vector<1x128xf32>
    %209 = arith.addf %205, %208 : vector<1x128xf32>
    %c58 = arith.constant 58 : index
    %210 = memref.load %arg1[%c58] : memref<112xf32, #tpu.memory_space<smem>>
    %211 = vector.broadcast %210 : f32 to vector<1x128xf32>
    %212 = arith.mulf %211, %17 : vector<1x128xf32>
    %213 = arith.addf %209, %212 : vector<1x128xf32>
    %c59 = arith.constant 59 : index
    %214 = memref.load %arg1[%c59] : memref<112xf32, #tpu.memory_space<smem>>
    %215 = vector.broadcast %214 : f32 to vector<1x128xf32>
    %216 = arith.mulf %215, %18 : vector<1x128xf32>
    %217 = arith.addf %213, %216 : vector<1x128xf32>
    %c10 = arith.constant 10 : index
    %218 = memref.load %arg1[%c10] : memref<112xf32, #tpu.memory_space<smem>>
    %219 = vector.broadcast %218 : f32 to vector<1x128xf32>
    %220 = arith.addf %217, %219 : vector<1x128xf32>
    %c60 = arith.constant 60 : index
    %221 = memref.load %arg1[%c60] : memref<112xf32, #tpu.memory_space<smem>>
    %222 = vector.broadcast %221 : f32 to vector<1x128xf32>
    %223 = arith.mulf %222, %15 : vector<1x128xf32>
    %c61 = arith.constant 61 : index
    %224 = memref.load %arg1[%c61] : memref<112xf32, #tpu.memory_space<smem>>
    %225 = vector.broadcast %224 : f32 to vector<1x128xf32>
    %226 = arith.mulf %225, %16 : vector<1x128xf32>
    %227 = arith.addf %223, %226 : vector<1x128xf32>
    %c62 = arith.constant 62 : index
    %228 = memref.load %arg1[%c62] : memref<112xf32, #tpu.memory_space<smem>>
    %229 = vector.broadcast %228 : f32 to vector<1x128xf32>
    %230 = arith.mulf %229, %17 : vector<1x128xf32>
    %231 = arith.addf %227, %230 : vector<1x128xf32>
    %c63 = arith.constant 63 : index
    %232 = memref.load %arg1[%c63] : memref<112xf32, #tpu.memory_space<smem>>
    %233 = vector.broadcast %232 : f32 to vector<1x128xf32>
    %234 = arith.mulf %233, %18 : vector<1x128xf32>
    %235 = arith.addf %231, %234 : vector<1x128xf32>
    %c11 = arith.constant 11 : index
    %236 = memref.load %arg1[%c11] : memref<112xf32, #tpu.memory_space<smem>>
    %237 = vector.broadcast %236 : f32 to vector<1x128xf32>
    %238 = arith.addf %235, %237 : vector<1x128xf32>
    %c64 = arith.constant 64 : index
    %239 = memref.load %arg1[%c64] : memref<112xf32, #tpu.memory_space<smem>>
    %240 = vector.broadcast %239 : f32 to vector<1x128xf32>
    %241 = arith.mulf %240, %15 : vector<1x128xf32>
    %c65 = arith.constant 65 : index
    %242 = memref.load %arg1[%c65] : memref<112xf32, #tpu.memory_space<smem>>
    %243 = vector.broadcast %242 : f32 to vector<1x128xf32>
    %244 = arith.mulf %243, %16 : vector<1x128xf32>
    %245 = arith.addf %241, %244 : vector<1x128xf32>
    %c66 = arith.constant 66 : index
    %246 = memref.load %arg1[%c66] : memref<112xf32, #tpu.memory_space<smem>>
    %247 = vector.broadcast %246 : f32 to vector<1x128xf32>
    %248 = arith.mulf %247, %17 : vector<1x128xf32>
    %249 = arith.addf %245, %248 : vector<1x128xf32>
    %c67 = arith.constant 67 : index
    %250 = memref.load %arg1[%c67] : memref<112xf32, #tpu.memory_space<smem>>
    %251 = vector.broadcast %250 : f32 to vector<1x128xf32>
    %252 = arith.mulf %251, %18 : vector<1x128xf32>
    %253 = arith.addf %249, %252 : vector<1x128xf32>
    %c12 = arith.constant 12 : index
    %254 = memref.load %arg1[%c12] : memref<112xf32, #tpu.memory_space<smem>>
    %255 = vector.broadcast %254 : f32 to vector<1x128xf32>
    %256 = arith.addf %253, %255 : vector<1x128xf32>
    %c68 = arith.constant 68 : index
    %257 = memref.load %arg1[%c68] : memref<112xf32, #tpu.memory_space<smem>>
    %258 = vector.broadcast %257 : f32 to vector<1x128xf32>
    %259 = arith.mulf %258, %15 : vector<1x128xf32>
    %c69 = arith.constant 69 : index
    %260 = memref.load %arg1[%c69] : memref<112xf32, #tpu.memory_space<smem>>
    %261 = vector.broadcast %260 : f32 to vector<1x128xf32>
    %262 = arith.mulf %261, %16 : vector<1x128xf32>
    %263 = arith.addf %259, %262 : vector<1x128xf32>
    %c70 = arith.constant 70 : index
    %264 = memref.load %arg1[%c70] : memref<112xf32, #tpu.memory_space<smem>>
    %265 = vector.broadcast %264 : f32 to vector<1x128xf32>
    %266 = arith.mulf %265, %17 : vector<1x128xf32>
    %267 = arith.addf %263, %266 : vector<1x128xf32>
    %c71 = arith.constant 71 : index
    %268 = memref.load %arg1[%c71] : memref<112xf32, #tpu.memory_space<smem>>
    %269 = vector.broadcast %268 : f32 to vector<1x128xf32>
    %270 = arith.mulf %269, %18 : vector<1x128xf32>
    %271 = arith.addf %267, %270 : vector<1x128xf32>
    %c13 = arith.constant 13 : index
    %272 = memref.load %arg1[%c13] : memref<112xf32, #tpu.memory_space<smem>>
    %273 = vector.broadcast %272 : f32 to vector<1x128xf32>
    %274 = arith.addf %271, %273 : vector<1x128xf32>
    %c72 = arith.constant 72 : index
    %275 = memref.load %arg1[%c72] : memref<112xf32, #tpu.memory_space<smem>>
    %276 = vector.broadcast %275 : f32 to vector<1x128xf32>
    %277 = arith.mulf %276, %15 : vector<1x128xf32>
    %c73 = arith.constant 73 : index
    %278 = memref.load %arg1[%c73] : memref<112xf32, #tpu.memory_space<smem>>
    %279 = vector.broadcast %278 : f32 to vector<1x128xf32>
    %280 = arith.mulf %279, %16 : vector<1x128xf32>
    %281 = arith.addf %277, %280 : vector<1x128xf32>
    %c74 = arith.constant 74 : index
    %282 = memref.load %arg1[%c74] : memref<112xf32, #tpu.memory_space<smem>>
    %283 = vector.broadcast %282 : f32 to vector<1x128xf32>
    %284 = arith.mulf %283, %17 : vector<1x128xf32>
    %285 = arith.addf %281, %284 : vector<1x128xf32>
    %c75 = arith.constant 75 : index
    %286 = memref.load %arg1[%c75] : memref<112xf32, #tpu.memory_space<smem>>
    %287 = vector.broadcast %286 : f32 to vector<1x128xf32>
    %288 = arith.mulf %287, %18 : vector<1x128xf32>
    %289 = arith.addf %285, %288 : vector<1x128xf32>
    %c14 = arith.constant 14 : index
    %290 = memref.load %arg1[%c14] : memref<112xf32, #tpu.memory_space<smem>>
    %291 = vector.broadcast %290 : f32 to vector<1x128xf32>
    %292 = arith.addf %289, %291 : vector<1x128xf32>
    %c76 = arith.constant 76 : index
    %293 = memref.load %arg1[%c76] : memref<112xf32, #tpu.memory_space<smem>>
    %294 = vector.broadcast %293 : f32 to vector<1x128xf32>
    %295 = arith.mulf %294, %15 : vector<1x128xf32>
    %c77 = arith.constant 77 : index
    %296 = memref.load %arg1[%c77] : memref<112xf32, #tpu.memory_space<smem>>
    %297 = vector.broadcast %296 : f32 to vector<1x128xf32>
    %298 = arith.mulf %297, %16 : vector<1x128xf32>
    %299 = arith.addf %295, %298 : vector<1x128xf32>
    %c78 = arith.constant 78 : index
    %300 = memref.load %arg1[%c78] : memref<112xf32, #tpu.memory_space<smem>>
    %301 = vector.broadcast %300 : f32 to vector<1x128xf32>
    %302 = arith.mulf %301, %17 : vector<1x128xf32>
    %303 = arith.addf %299, %302 : vector<1x128xf32>
    %c79 = arith.constant 79 : index
    %304 = memref.load %arg1[%c79] : memref<112xf32, #tpu.memory_space<smem>>
    %305 = vector.broadcast %304 : f32 to vector<1x128xf32>
    %306 = arith.mulf %305, %18 : vector<1x128xf32>
    %307 = arith.addf %303, %306 : vector<1x128xf32>
    %c15 = arith.constant 15 : index
    %308 = memref.load %arg1[%c15] : memref<112xf32, #tpu.memory_space<smem>>
    %309 = vector.broadcast %308 : f32 to vector<1x128xf32>
    %310 = arith.addf %307, %309 : vector<1x128xf32>
    %311 = arith.mulf %9, %19 : vector<1x128xf32>
    %312 = arith.mulf %10, %20 : vector<1x128xf32>
    %313 = arith.mulf %11, %21 : vector<1x128xf32>
    %314 = arith.mulf %12, %22 : vector<1x128xf32>
    %315 = arith.mulf %9, %9 : vector<1x128xf32>
    %316 = arith.mulf %9, %10 : vector<1x128xf32>
    %317 = arith.mulf %9, %11 : vector<1x128xf32>
    %318 = arith.mulf %9, %12 : vector<1x128xf32>
    %319 = arith.mulf %10, %9 : vector<1x128xf32>
    %320 = arith.mulf %10, %10 : vector<1x128xf32>
    %321 = arith.mulf %10, %11 : vector<1x128xf32>
    %322 = arith.mulf %10, %12 : vector<1x128xf32>
    %323 = arith.mulf %11, %9 : vector<1x128xf32>
    %324 = arith.mulf %11, %10 : vector<1x128xf32>
    %325 = arith.mulf %11, %11 : vector<1x128xf32>
    %326 = arith.mulf %11, %12 : vector<1x128xf32>
    %327 = arith.mulf %12, %9 : vector<1x128xf32>
    %328 = arith.mulf %12, %10 : vector<1x128xf32>
    %329 = arith.mulf %12, %11 : vector<1x128xf32>
    %330 = arith.mulf %12, %12 : vector<1x128xf32>
    %331 = arith.mulf %9, %311 : vector<1x128xf32>
    %332 = arith.mulf %9, %312 : vector<1x128xf32>
    %333 = arith.mulf %9, %313 : vector<1x128xf32>
    %334 = arith.mulf %9, %314 : vector<1x128xf32>
    %335 = arith.mulf %10, %311 : vector<1x128xf32>
    %336 = arith.mulf %10, %312 : vector<1x128xf32>
    %337 = arith.mulf %10, %313 : vector<1x128xf32>
    %338 = arith.mulf %10, %314 : vector<1x128xf32>
    %339 = arith.mulf %11, %311 : vector<1x128xf32>
    %340 = arith.mulf %11, %312 : vector<1x128xf32>
    %341 = arith.mulf %11, %313 : vector<1x128xf32>
    %342 = arith.mulf %11, %314 : vector<1x128xf32>
    %343 = arith.mulf %12, %311 : vector<1x128xf32>
    %344 = arith.mulf %12, %312 : vector<1x128xf32>
    %345 = arith.mulf %12, %313 : vector<1x128xf32>
    %346 = arith.mulf %12, %314 : vector<1x128xf32>
    %c16_6 = arith.constant 16 : index
    %347 = memref.load %arg1[%c16_6] : memref<112xf32, #tpu.memory_space<smem>>
    %348 = vector.broadcast %347 : f32 to vector<1x128xf32>
    %349 = arith.mulf %348, %331 : vector<1x128xf32>
    %c16_7 = arith.constant 16 : index
    %350 = memref.load %arg1[%c16_7] : memref<112xf32, #tpu.memory_space<smem>>
    %351 = vector.broadcast %350 : f32 to vector<1x128xf32>
    %352 = arith.mulf %351, %315 : vector<1x128xf32>
    %c17_8 = arith.constant 17 : index
    %353 = memref.load %arg1[%c17_8] : memref<112xf32, #tpu.memory_space<smem>>
    %354 = vector.broadcast %353 : f32 to vector<1x128xf32>
    %355 = arith.mulf %354, %332 : vector<1x128xf32>
    %c20_9 = arith.constant 20 : index
    %356 = memref.load %arg1[%c20_9] : memref<112xf32, #tpu.memory_space<smem>>
    %357 = vector.broadcast %356 : f32 to vector<1x128xf32>
    %358 = arith.mulf %357, %316 : vector<1x128xf32>
    %359 = arith.addf %349, %355 : vector<1x128xf32>
    %360 = arith.addf %352, %358 : vector<1x128xf32>
    %c18_10 = arith.constant 18 : index
    %361 = memref.load %arg1[%c18_10] : memref<112xf32, #tpu.memory_space<smem>>
    %362 = vector.broadcast %361 : f32 to vector<1x128xf32>
    %363 = arith.mulf %362, %333 : vector<1x128xf32>
    %c24_11 = arith.constant 24 : index
    %364 = memref.load %arg1[%c24_11] : memref<112xf32, #tpu.memory_space<smem>>
    %365 = vector.broadcast %364 : f32 to vector<1x128xf32>
    %366 = arith.mulf %365, %317 : vector<1x128xf32>
    %367 = arith.addf %359, %363 : vector<1x128xf32>
    %368 = arith.addf %360, %366 : vector<1x128xf32>
    %c19_12 = arith.constant 19 : index
    %369 = memref.load %arg1[%c19_12] : memref<112xf32, #tpu.memory_space<smem>>
    %370 = vector.broadcast %369 : f32 to vector<1x128xf32>
    %371 = arith.mulf %370, %334 : vector<1x128xf32>
    %c28_13 = arith.constant 28 : index
    %372 = memref.load %arg1[%c28_13] : memref<112xf32, #tpu.memory_space<smem>>
    %373 = vector.broadcast %372 : f32 to vector<1x128xf32>
    %374 = arith.mulf %373, %318 : vector<1x128xf32>
    %375 = arith.addf %367, %371 : vector<1x128xf32>
    %376 = arith.addf %368, %374 : vector<1x128xf32>
    %c20_14 = arith.constant 20 : index
    %377 = memref.load %arg1[%c20_14] : memref<112xf32, #tpu.memory_space<smem>>
    %378 = vector.broadcast %377 : f32 to vector<1x128xf32>
    %379 = arith.mulf %378, %335 : vector<1x128xf32>
    %c32_15 = arith.constant 32 : index
    %380 = memref.load %arg1[%c32_15] : memref<112xf32, #tpu.memory_space<smem>>
    %381 = vector.broadcast %380 : f32 to vector<1x128xf32>
    %382 = arith.mulf %381, %319 : vector<1x128xf32>
    %383 = arith.addf %375, %379 : vector<1x128xf32>
    %384 = arith.addf %376, %382 : vector<1x128xf32>
    %c21_16 = arith.constant 21 : index
    %385 = memref.load %arg1[%c21_16] : memref<112xf32, #tpu.memory_space<smem>>
    %386 = vector.broadcast %385 : f32 to vector<1x128xf32>
    %387 = arith.mulf %386, %336 : vector<1x128xf32>
    %c36_17 = arith.constant 36 : index
    %388 = memref.load %arg1[%c36_17] : memref<112xf32, #tpu.memory_space<smem>>
    %389 = vector.broadcast %388 : f32 to vector<1x128xf32>
    %390 = arith.mulf %389, %320 : vector<1x128xf32>
    %391 = arith.addf %383, %387 : vector<1x128xf32>
    %392 = arith.addf %384, %390 : vector<1x128xf32>
    %c22_18 = arith.constant 22 : index
    %393 = memref.load %arg1[%c22_18] : memref<112xf32, #tpu.memory_space<smem>>
    %394 = vector.broadcast %393 : f32 to vector<1x128xf32>
    %395 = arith.mulf %394, %337 : vector<1x128xf32>
    %c40_19 = arith.constant 40 : index
    %396 = memref.load %arg1[%c40_19] : memref<112xf32, #tpu.memory_space<smem>>
    %397 = vector.broadcast %396 : f32 to vector<1x128xf32>
    %398 = arith.mulf %397, %321 : vector<1x128xf32>
    %399 = arith.addf %391, %395 : vector<1x128xf32>
    %400 = arith.addf %392, %398 : vector<1x128xf32>
    %c23_20 = arith.constant 23 : index
    %401 = memref.load %arg1[%c23_20] : memref<112xf32, #tpu.memory_space<smem>>
    %402 = vector.broadcast %401 : f32 to vector<1x128xf32>
    %403 = arith.mulf %402, %338 : vector<1x128xf32>
    %c44_21 = arith.constant 44 : index
    %404 = memref.load %arg1[%c44_21] : memref<112xf32, #tpu.memory_space<smem>>
    %405 = vector.broadcast %404 : f32 to vector<1x128xf32>
    %406 = arith.mulf %405, %322 : vector<1x128xf32>
    %407 = arith.addf %399, %403 : vector<1x128xf32>
    %408 = arith.addf %400, %406 : vector<1x128xf32>
    %c24_22 = arith.constant 24 : index
    %409 = memref.load %arg1[%c24_22] : memref<112xf32, #tpu.memory_space<smem>>
    %410 = vector.broadcast %409 : f32 to vector<1x128xf32>
    %411 = arith.mulf %410, %339 : vector<1x128xf32>
    %c48_23 = arith.constant 48 : index
    %412 = memref.load %arg1[%c48_23] : memref<112xf32, #tpu.memory_space<smem>>
    %413 = vector.broadcast %412 : f32 to vector<1x128xf32>
    %414 = arith.mulf %413, %323 : vector<1x128xf32>
    %415 = arith.addf %407, %411 : vector<1x128xf32>
    %416 = arith.addf %408, %414 : vector<1x128xf32>
    %c25_24 = arith.constant 25 : index
    %417 = memref.load %arg1[%c25_24] : memref<112xf32, #tpu.memory_space<smem>>
    %418 = vector.broadcast %417 : f32 to vector<1x128xf32>
    %419 = arith.mulf %418, %340 : vector<1x128xf32>
    %c52_25 = arith.constant 52 : index
    %420 = memref.load %arg1[%c52_25] : memref<112xf32, #tpu.memory_space<smem>>
    %421 = vector.broadcast %420 : f32 to vector<1x128xf32>
    %422 = arith.mulf %421, %324 : vector<1x128xf32>
    %423 = arith.addf %415, %419 : vector<1x128xf32>
    %424 = arith.addf %416, %422 : vector<1x128xf32>
    %c26_26 = arith.constant 26 : index
    %425 = memref.load %arg1[%c26_26] : memref<112xf32, #tpu.memory_space<smem>>
    %426 = vector.broadcast %425 : f32 to vector<1x128xf32>
    %427 = arith.mulf %426, %341 : vector<1x128xf32>
    %c56_27 = arith.constant 56 : index
    %428 = memref.load %arg1[%c56_27] : memref<112xf32, #tpu.memory_space<smem>>
    %429 = vector.broadcast %428 : f32 to vector<1x128xf32>
    %430 = arith.mulf %429, %325 : vector<1x128xf32>
    %431 = arith.addf %423, %427 : vector<1x128xf32>
    %432 = arith.addf %424, %430 : vector<1x128xf32>
    %c27_28 = arith.constant 27 : index
    %433 = memref.load %arg1[%c27_28] : memref<112xf32, #tpu.memory_space<smem>>
    %434 = vector.broadcast %433 : f32 to vector<1x128xf32>
    %435 = arith.mulf %434, %342 : vector<1x128xf32>
    %c60_29 = arith.constant 60 : index
    %436 = memref.load %arg1[%c60_29] : memref<112xf32, #tpu.memory_space<smem>>
    %437 = vector.broadcast %436 : f32 to vector<1x128xf32>
    %438 = arith.mulf %437, %326 : vector<1x128xf32>
    %439 = arith.addf %431, %435 : vector<1x128xf32>
    %440 = arith.addf %432, %438 : vector<1x128xf32>
    %c28_30 = arith.constant 28 : index
    %441 = memref.load %arg1[%c28_30] : memref<112xf32, #tpu.memory_space<smem>>
    %442 = vector.broadcast %441 : f32 to vector<1x128xf32>
    %443 = arith.mulf %442, %343 : vector<1x128xf32>
    %c64_31 = arith.constant 64 : index
    %444 = memref.load %arg1[%c64_31] : memref<112xf32, #tpu.memory_space<smem>>
    %445 = vector.broadcast %444 : f32 to vector<1x128xf32>
    %446 = arith.mulf %445, %327 : vector<1x128xf32>
    %447 = arith.addf %439, %443 : vector<1x128xf32>
    %448 = arith.addf %440, %446 : vector<1x128xf32>
    %c29_32 = arith.constant 29 : index
    %449 = memref.load %arg1[%c29_32] : memref<112xf32, #tpu.memory_space<smem>>
    %450 = vector.broadcast %449 : f32 to vector<1x128xf32>
    %451 = arith.mulf %450, %344 : vector<1x128xf32>
    %c68_33 = arith.constant 68 : index
    %452 = memref.load %arg1[%c68_33] : memref<112xf32, #tpu.memory_space<smem>>
    %453 = vector.broadcast %452 : f32 to vector<1x128xf32>
    %454 = arith.mulf %453, %328 : vector<1x128xf32>
    %455 = arith.addf %447, %451 : vector<1x128xf32>
    %456 = arith.addf %448, %454 : vector<1x128xf32>
    %c30_34 = arith.constant 30 : index
    %457 = memref.load %arg1[%c30_34] : memref<112xf32, #tpu.memory_space<smem>>
    %458 = vector.broadcast %457 : f32 to vector<1x128xf32>
    %459 = arith.mulf %458, %345 : vector<1x128xf32>
    %c72_35 = arith.constant 72 : index
    %460 = memref.load %arg1[%c72_35] : memref<112xf32, #tpu.memory_space<smem>>
    %461 = vector.broadcast %460 : f32 to vector<1x128xf32>
    %462 = arith.mulf %461, %329 : vector<1x128xf32>
    %463 = arith.addf %455, %459 : vector<1x128xf32>
    %464 = arith.addf %456, %462 : vector<1x128xf32>
    %c31_36 = arith.constant 31 : index
    %465 = memref.load %arg1[%c31_36] : memref<112xf32, #tpu.memory_space<smem>>
    %466 = vector.broadcast %465 : f32 to vector<1x128xf32>
    %467 = arith.mulf %466, %346 : vector<1x128xf32>
    %c76_37 = arith.constant 76 : index
    %468 = memref.load %arg1[%c76_37] : memref<112xf32, #tpu.memory_space<smem>>
    %469 = vector.broadcast %468 : f32 to vector<1x128xf32>
    %470 = arith.mulf %469, %330 : vector<1x128xf32>
    %471 = arith.addf %463, %467 : vector<1x128xf32>
    %472 = arith.addf %464, %470 : vector<1x128xf32>
    %cst = arith.constant 0.000000e+00 : f32
    %473 = vector.broadcast %cst : f32 to vector<1x128xf32>
    %474 = arith.subf %473, %471 : vector<1x128xf32>
    %cst_38 = arith.constant 5.000000e-01 : f32
    %475 = vector.broadcast %cst_38 : f32 to vector<1x128xf32>
    %476 = arith.mulf %475, %19 : vector<1x128xf32>
    %477 = arith.mulf %476, %472 : vector<1x128xf32>
    %478 = arith.addf %474, %477 : vector<1x128xf32>
    %c32_39 = arith.constant 32 : index
    %479 = memref.load %arg1[%c32_39] : memref<112xf32, #tpu.memory_space<smem>>
    %480 = vector.broadcast %479 : f32 to vector<1x128xf32>
    %481 = arith.mulf %480, %331 : vector<1x128xf32>
    %c17_40 = arith.constant 17 : index
    %482 = memref.load %arg1[%c17_40] : memref<112xf32, #tpu.memory_space<smem>>
    %483 = vector.broadcast %482 : f32 to vector<1x128xf32>
    %484 = arith.mulf %483, %315 : vector<1x128xf32>
    %c33_41 = arith.constant 33 : index
    %485 = memref.load %arg1[%c33_41] : memref<112xf32, #tpu.memory_space<smem>>
    %486 = vector.broadcast %485 : f32 to vector<1x128xf32>
    %487 = arith.mulf %486, %332 : vector<1x128xf32>
    %c21_42 = arith.constant 21 : index
    %488 = memref.load %arg1[%c21_42] : memref<112xf32, #tpu.memory_space<smem>>
    %489 = vector.broadcast %488 : f32 to vector<1x128xf32>
    %490 = arith.mulf %489, %316 : vector<1x128xf32>
    %491 = arith.addf %481, %487 : vector<1x128xf32>
    %492 = arith.addf %484, %490 : vector<1x128xf32>
    %c34_43 = arith.constant 34 : index
    %493 = memref.load %arg1[%c34_43] : memref<112xf32, #tpu.memory_space<smem>>
    %494 = vector.broadcast %493 : f32 to vector<1x128xf32>
    %495 = arith.mulf %494, %333 : vector<1x128xf32>
    %c25_44 = arith.constant 25 : index
    %496 = memref.load %arg1[%c25_44] : memref<112xf32, #tpu.memory_space<smem>>
    %497 = vector.broadcast %496 : f32 to vector<1x128xf32>
    %498 = arith.mulf %497, %317 : vector<1x128xf32>
    %499 = arith.addf %491, %495 : vector<1x128xf32>
    %500 = arith.addf %492, %498 : vector<1x128xf32>
    %c35_45 = arith.constant 35 : index
    %501 = memref.load %arg1[%c35_45] : memref<112xf32, #tpu.memory_space<smem>>
    %502 = vector.broadcast %501 : f32 to vector<1x128xf32>
    %503 = arith.mulf %502, %334 : vector<1x128xf32>
    %c29_46 = arith.constant 29 : index
    %504 = memref.load %arg1[%c29_46] : memref<112xf32, #tpu.memory_space<smem>>
    %505 = vector.broadcast %504 : f32 to vector<1x128xf32>
    %506 = arith.mulf %505, %318 : vector<1x128xf32>
    %507 = arith.addf %499, %503 : vector<1x128xf32>
    %508 = arith.addf %500, %506 : vector<1x128xf32>
    %c36_47 = arith.constant 36 : index
    %509 = memref.load %arg1[%c36_47] : memref<112xf32, #tpu.memory_space<smem>>
    %510 = vector.broadcast %509 : f32 to vector<1x128xf32>
    %511 = arith.mulf %510, %335 : vector<1x128xf32>
    %c33_48 = arith.constant 33 : index
    %512 = memref.load %arg1[%c33_48] : memref<112xf32, #tpu.memory_space<smem>>
    %513 = vector.broadcast %512 : f32 to vector<1x128xf32>
    %514 = arith.mulf %513, %319 : vector<1x128xf32>
    %515 = arith.addf %507, %511 : vector<1x128xf32>
    %516 = arith.addf %508, %514 : vector<1x128xf32>
    %c37_49 = arith.constant 37 : index
    %517 = memref.load %arg1[%c37_49] : memref<112xf32, #tpu.memory_space<smem>>
    %518 = vector.broadcast %517 : f32 to vector<1x128xf32>
    %519 = arith.mulf %518, %336 : vector<1x128xf32>
    %c37_50 = arith.constant 37 : index
    %520 = memref.load %arg1[%c37_50] : memref<112xf32, #tpu.memory_space<smem>>
    %521 = vector.broadcast %520 : f32 to vector<1x128xf32>
    %522 = arith.mulf %521, %320 : vector<1x128xf32>
    %523 = arith.addf %515, %519 : vector<1x128xf32>
    %524 = arith.addf %516, %522 : vector<1x128xf32>
    %c38_51 = arith.constant 38 : index
    %525 = memref.load %arg1[%c38_51] : memref<112xf32, #tpu.memory_space<smem>>
    %526 = vector.broadcast %525 : f32 to vector<1x128xf32>
    %527 = arith.mulf %526, %337 : vector<1x128xf32>
    %c41_52 = arith.constant 41 : index
    %528 = memref.load %arg1[%c41_52] : memref<112xf32, #tpu.memory_space<smem>>
    %529 = vector.broadcast %528 : f32 to vector<1x128xf32>
    %530 = arith.mulf %529, %321 : vector<1x128xf32>
    %531 = arith.addf %523, %527 : vector<1x128xf32>
    %532 = arith.addf %524, %530 : vector<1x128xf32>
    %c39_53 = arith.constant 39 : index
    %533 = memref.load %arg1[%c39_53] : memref<112xf32, #tpu.memory_space<smem>>
    %534 = vector.broadcast %533 : f32 to vector<1x128xf32>
    %535 = arith.mulf %534, %338 : vector<1x128xf32>
    %c45_54 = arith.constant 45 : index
    %536 = memref.load %arg1[%c45_54] : memref<112xf32, #tpu.memory_space<smem>>
    %537 = vector.broadcast %536 : f32 to vector<1x128xf32>
    %538 = arith.mulf %537, %322 : vector<1x128xf32>
    %539 = arith.addf %531, %535 : vector<1x128xf32>
    %540 = arith.addf %532, %538 : vector<1x128xf32>
    %c40_55 = arith.constant 40 : index
    %541 = memref.load %arg1[%c40_55] : memref<112xf32, #tpu.memory_space<smem>>
    %542 = vector.broadcast %541 : f32 to vector<1x128xf32>
    %543 = arith.mulf %542, %339 : vector<1x128xf32>
    %c49_56 = arith.constant 49 : index
    %544 = memref.load %arg1[%c49_56] : memref<112xf32, #tpu.memory_space<smem>>
    %545 = vector.broadcast %544 : f32 to vector<1x128xf32>
    %546 = arith.mulf %545, %323 : vector<1x128xf32>
    %547 = arith.addf %539, %543 : vector<1x128xf32>
    %548 = arith.addf %540, %546 : vector<1x128xf32>
    %c41_57 = arith.constant 41 : index
    %549 = memref.load %arg1[%c41_57] : memref<112xf32, #tpu.memory_space<smem>>
    %550 = vector.broadcast %549 : f32 to vector<1x128xf32>
    %551 = arith.mulf %550, %340 : vector<1x128xf32>
    %c53_58 = arith.constant 53 : index
    %552 = memref.load %arg1[%c53_58] : memref<112xf32, #tpu.memory_space<smem>>
    %553 = vector.broadcast %552 : f32 to vector<1x128xf32>
    %554 = arith.mulf %553, %324 : vector<1x128xf32>
    %555 = arith.addf %547, %551 : vector<1x128xf32>
    %556 = arith.addf %548, %554 : vector<1x128xf32>
    %c42_59 = arith.constant 42 : index
    %557 = memref.load %arg1[%c42_59] : memref<112xf32, #tpu.memory_space<smem>>
    %558 = vector.broadcast %557 : f32 to vector<1x128xf32>
    %559 = arith.mulf %558, %341 : vector<1x128xf32>
    %c57_60 = arith.constant 57 : index
    %560 = memref.load %arg1[%c57_60] : memref<112xf32, #tpu.memory_space<smem>>
    %561 = vector.broadcast %560 : f32 to vector<1x128xf32>
    %562 = arith.mulf %561, %325 : vector<1x128xf32>
    %563 = arith.addf %555, %559 : vector<1x128xf32>
    %564 = arith.addf %556, %562 : vector<1x128xf32>
    %c43_61 = arith.constant 43 : index
    %565 = memref.load %arg1[%c43_61] : memref<112xf32, #tpu.memory_space<smem>>
    %566 = vector.broadcast %565 : f32 to vector<1x128xf32>
    %567 = arith.mulf %566, %342 : vector<1x128xf32>
    %c61_62 = arith.constant 61 : index
    %568 = memref.load %arg1[%c61_62] : memref<112xf32, #tpu.memory_space<smem>>
    %569 = vector.broadcast %568 : f32 to vector<1x128xf32>
    %570 = arith.mulf %569, %326 : vector<1x128xf32>
    %571 = arith.addf %563, %567 : vector<1x128xf32>
    %572 = arith.addf %564, %570 : vector<1x128xf32>
    %c44_63 = arith.constant 44 : index
    %573 = memref.load %arg1[%c44_63] : memref<112xf32, #tpu.memory_space<smem>>
    %574 = vector.broadcast %573 : f32 to vector<1x128xf32>
    %575 = arith.mulf %574, %343 : vector<1x128xf32>
    %c65_64 = arith.constant 65 : index
    %576 = memref.load %arg1[%c65_64] : memref<112xf32, #tpu.memory_space<smem>>
    %577 = vector.broadcast %576 : f32 to vector<1x128xf32>
    %578 = arith.mulf %577, %327 : vector<1x128xf32>
    %579 = arith.addf %571, %575 : vector<1x128xf32>
    %580 = arith.addf %572, %578 : vector<1x128xf32>
    %c45_65 = arith.constant 45 : index
    %581 = memref.load %arg1[%c45_65] : memref<112xf32, #tpu.memory_space<smem>>
    %582 = vector.broadcast %581 : f32 to vector<1x128xf32>
    %583 = arith.mulf %582, %344 : vector<1x128xf32>
    %c69_66 = arith.constant 69 : index
    %584 = memref.load %arg1[%c69_66] : memref<112xf32, #tpu.memory_space<smem>>
    %585 = vector.broadcast %584 : f32 to vector<1x128xf32>
    %586 = arith.mulf %585, %328 : vector<1x128xf32>
    %587 = arith.addf %579, %583 : vector<1x128xf32>
    %588 = arith.addf %580, %586 : vector<1x128xf32>
    %c46_67 = arith.constant 46 : index
    %589 = memref.load %arg1[%c46_67] : memref<112xf32, #tpu.memory_space<smem>>
    %590 = vector.broadcast %589 : f32 to vector<1x128xf32>
    %591 = arith.mulf %590, %345 : vector<1x128xf32>
    %c73_68 = arith.constant 73 : index
    %592 = memref.load %arg1[%c73_68] : memref<112xf32, #tpu.memory_space<smem>>
    %593 = vector.broadcast %592 : f32 to vector<1x128xf32>
    %594 = arith.mulf %593, %329 : vector<1x128xf32>
    %595 = arith.addf %587, %591 : vector<1x128xf32>
    %596 = arith.addf %588, %594 : vector<1x128xf32>
    %c47_69 = arith.constant 47 : index
    %597 = memref.load %arg1[%c47_69] : memref<112xf32, #tpu.memory_space<smem>>
    %598 = vector.broadcast %597 : f32 to vector<1x128xf32>
    %599 = arith.mulf %598, %346 : vector<1x128xf32>
    %c77_70 = arith.constant 77 : index
    %600 = memref.load %arg1[%c77_70] : memref<112xf32, #tpu.memory_space<smem>>
    %601 = vector.broadcast %600 : f32 to vector<1x128xf32>
    %602 = arith.mulf %601, %330 : vector<1x128xf32>
    %603 = arith.addf %595, %599 : vector<1x128xf32>
    %604 = arith.addf %596, %602 : vector<1x128xf32>
    %cst_71 = arith.constant 0.000000e+00 : f32
    %605 = vector.broadcast %cst_71 : f32 to vector<1x128xf32>
    %606 = arith.subf %605, %603 : vector<1x128xf32>
    %cst_72 = arith.constant 5.000000e-01 : f32
    %607 = vector.broadcast %cst_72 : f32 to vector<1x128xf32>
    %608 = arith.mulf %607, %20 : vector<1x128xf32>
    %609 = arith.mulf %608, %604 : vector<1x128xf32>
    %610 = arith.addf %606, %609 : vector<1x128xf32>
    %c48_73 = arith.constant 48 : index
    %611 = memref.load %arg1[%c48_73] : memref<112xf32, #tpu.memory_space<smem>>
    %612 = vector.broadcast %611 : f32 to vector<1x128xf32>
    %613 = arith.mulf %612, %331 : vector<1x128xf32>
    %c18_74 = arith.constant 18 : index
    %614 = memref.load %arg1[%c18_74] : memref<112xf32, #tpu.memory_space<smem>>
    %615 = vector.broadcast %614 : f32 to vector<1x128xf32>
    %616 = arith.mulf %615, %315 : vector<1x128xf32>
    %c49_75 = arith.constant 49 : index
    %617 = memref.load %arg1[%c49_75] : memref<112xf32, #tpu.memory_space<smem>>
    %618 = vector.broadcast %617 : f32 to vector<1x128xf32>
    %619 = arith.mulf %618, %332 : vector<1x128xf32>
    %c22_76 = arith.constant 22 : index
    %620 = memref.load %arg1[%c22_76] : memref<112xf32, #tpu.memory_space<smem>>
    %621 = vector.broadcast %620 : f32 to vector<1x128xf32>
    %622 = arith.mulf %621, %316 : vector<1x128xf32>
    %623 = arith.addf %613, %619 : vector<1x128xf32>
    %624 = arith.addf %616, %622 : vector<1x128xf32>
    %c50_77 = arith.constant 50 : index
    %625 = memref.load %arg1[%c50_77] : memref<112xf32, #tpu.memory_space<smem>>
    %626 = vector.broadcast %625 : f32 to vector<1x128xf32>
    %627 = arith.mulf %626, %333 : vector<1x128xf32>
    %c26_78 = arith.constant 26 : index
    %628 = memref.load %arg1[%c26_78] : memref<112xf32, #tpu.memory_space<smem>>
    %629 = vector.broadcast %628 : f32 to vector<1x128xf32>
    %630 = arith.mulf %629, %317 : vector<1x128xf32>
    %631 = arith.addf %623, %627 : vector<1x128xf32>
    %632 = arith.addf %624, %630 : vector<1x128xf32>
    %c51_79 = arith.constant 51 : index
    %633 = memref.load %arg1[%c51_79] : memref<112xf32, #tpu.memory_space<smem>>
    %634 = vector.broadcast %633 : f32 to vector<1x128xf32>
    %635 = arith.mulf %634, %334 : vector<1x128xf32>
    %c30_80 = arith.constant 30 : index
    %636 = memref.load %arg1[%c30_80] : memref<112xf32, #tpu.memory_space<smem>>
    %637 = vector.broadcast %636 : f32 to vector<1x128xf32>
    %638 = arith.mulf %637, %318 : vector<1x128xf32>
    %639 = arith.addf %631, %635 : vector<1x128xf32>
    %640 = arith.addf %632, %638 : vector<1x128xf32>
    %c52_81 = arith.constant 52 : index
    %641 = memref.load %arg1[%c52_81] : memref<112xf32, #tpu.memory_space<smem>>
    %642 = vector.broadcast %641 : f32 to vector<1x128xf32>
    %643 = arith.mulf %642, %335 : vector<1x128xf32>
    %c34_82 = arith.constant 34 : index
    %644 = memref.load %arg1[%c34_82] : memref<112xf32, #tpu.memory_space<smem>>
    %645 = vector.broadcast %644 : f32 to vector<1x128xf32>
    %646 = arith.mulf %645, %319 : vector<1x128xf32>
    %647 = arith.addf %639, %643 : vector<1x128xf32>
    %648 = arith.addf %640, %646 : vector<1x128xf32>
    %c53_83 = arith.constant 53 : index
    %649 = memref.load %arg1[%c53_83] : memref<112xf32, #tpu.memory_space<smem>>
    %650 = vector.broadcast %649 : f32 to vector<1x128xf32>
    %651 = arith.mulf %650, %336 : vector<1x128xf32>
    %c38_84 = arith.constant 38 : index
    %652 = memref.load %arg1[%c38_84] : memref<112xf32, #tpu.memory_space<smem>>
    %653 = vector.broadcast %652 : f32 to vector<1x128xf32>
    %654 = arith.mulf %653, %320 : vector<1x128xf32>
    %655 = arith.addf %647, %651 : vector<1x128xf32>
    %656 = arith.addf %648, %654 : vector<1x128xf32>
    %c54_85 = arith.constant 54 : index
    %657 = memref.load %arg1[%c54_85] : memref<112xf32, #tpu.memory_space<smem>>
    %658 = vector.broadcast %657 : f32 to vector<1x128xf32>
    %659 = arith.mulf %658, %337 : vector<1x128xf32>
    %c42_86 = arith.constant 42 : index
    %660 = memref.load %arg1[%c42_86] : memref<112xf32, #tpu.memory_space<smem>>
    %661 = vector.broadcast %660 : f32 to vector<1x128xf32>
    %662 = arith.mulf %661, %321 : vector<1x128xf32>
    %663 = arith.addf %655, %659 : vector<1x128xf32>
    %664 = arith.addf %656, %662 : vector<1x128xf32>
    %c55_87 = arith.constant 55 : index
    %665 = memref.load %arg1[%c55_87] : memref<112xf32, #tpu.memory_space<smem>>
    %666 = vector.broadcast %665 : f32 to vector<1x128xf32>
    %667 = arith.mulf %666, %338 : vector<1x128xf32>
    %c46_88 = arith.constant 46 : index
    %668 = memref.load %arg1[%c46_88] : memref<112xf32, #tpu.memory_space<smem>>
    %669 = vector.broadcast %668 : f32 to vector<1x128xf32>
    %670 = arith.mulf %669, %322 : vector<1x128xf32>
    %671 = arith.addf %663, %667 : vector<1x128xf32>
    %672 = arith.addf %664, %670 : vector<1x128xf32>
    %c56_89 = arith.constant 56 : index
    %673 = memref.load %arg1[%c56_89] : memref<112xf32, #tpu.memory_space<smem>>
    %674 = vector.broadcast %673 : f32 to vector<1x128xf32>
    %675 = arith.mulf %674, %339 : vector<1x128xf32>
    %c50_90 = arith.constant 50 : index
    %676 = memref.load %arg1[%c50_90] : memref<112xf32, #tpu.memory_space<smem>>
    %677 = vector.broadcast %676 : f32 to vector<1x128xf32>
    %678 = arith.mulf %677, %323 : vector<1x128xf32>
    %679 = arith.addf %671, %675 : vector<1x128xf32>
    %680 = arith.addf %672, %678 : vector<1x128xf32>
    %c57_91 = arith.constant 57 : index
    %681 = memref.load %arg1[%c57_91] : memref<112xf32, #tpu.memory_space<smem>>
    %682 = vector.broadcast %681 : f32 to vector<1x128xf32>
    %683 = arith.mulf %682, %340 : vector<1x128xf32>
    %c54_92 = arith.constant 54 : index
    %684 = memref.load %arg1[%c54_92] : memref<112xf32, #tpu.memory_space<smem>>
    %685 = vector.broadcast %684 : f32 to vector<1x128xf32>
    %686 = arith.mulf %685, %324 : vector<1x128xf32>
    %687 = arith.addf %679, %683 : vector<1x128xf32>
    %688 = arith.addf %680, %686 : vector<1x128xf32>
    %c58_93 = arith.constant 58 : index
    %689 = memref.load %arg1[%c58_93] : memref<112xf32, #tpu.memory_space<smem>>
    %690 = vector.broadcast %689 : f32 to vector<1x128xf32>
    %691 = arith.mulf %690, %341 : vector<1x128xf32>
    %c58_94 = arith.constant 58 : index
    %692 = memref.load %arg1[%c58_94] : memref<112xf32, #tpu.memory_space<smem>>
    %693 = vector.broadcast %692 : f32 to vector<1x128xf32>
    %694 = arith.mulf %693, %325 : vector<1x128xf32>
    %695 = arith.addf %687, %691 : vector<1x128xf32>
    %696 = arith.addf %688, %694 : vector<1x128xf32>
    %c59_95 = arith.constant 59 : index
    %697 = memref.load %arg1[%c59_95] : memref<112xf32, #tpu.memory_space<smem>>
    %698 = vector.broadcast %697 : f32 to vector<1x128xf32>
    %699 = arith.mulf %698, %342 : vector<1x128xf32>
    %c62_96 = arith.constant 62 : index
    %700 = memref.load %arg1[%c62_96] : memref<112xf32, #tpu.memory_space<smem>>
    %701 = vector.broadcast %700 : f32 to vector<1x128xf32>
    %702 = arith.mulf %701, %326 : vector<1x128xf32>
    %703 = arith.addf %695, %699 : vector<1x128xf32>
    %704 = arith.addf %696, %702 : vector<1x128xf32>
    %c60_97 = arith.constant 60 : index
    %705 = memref.load %arg1[%c60_97] : memref<112xf32, #tpu.memory_space<smem>>
    %706 = vector.broadcast %705 : f32 to vector<1x128xf32>
    %707 = arith.mulf %706, %343 : vector<1x128xf32>
    %c66_98 = arith.constant 66 : index
    %708 = memref.load %arg1[%c66_98] : memref<112xf32, #tpu.memory_space<smem>>
    %709 = vector.broadcast %708 : f32 to vector<1x128xf32>
    %710 = arith.mulf %709, %327 : vector<1x128xf32>
    %711 = arith.addf %703, %707 : vector<1x128xf32>
    %712 = arith.addf %704, %710 : vector<1x128xf32>
    %c61_99 = arith.constant 61 : index
    %713 = memref.load %arg1[%c61_99] : memref<112xf32, #tpu.memory_space<smem>>
    %714 = vector.broadcast %713 : f32 to vector<1x128xf32>
    %715 = arith.mulf %714, %344 : vector<1x128xf32>
    %c70_100 = arith.constant 70 : index
    %716 = memref.load %arg1[%c70_100] : memref<112xf32, #tpu.memory_space<smem>>
    %717 = vector.broadcast %716 : f32 to vector<1x128xf32>
    %718 = arith.mulf %717, %328 : vector<1x128xf32>
    %719 = arith.addf %711, %715 : vector<1x128xf32>
    %720 = arith.addf %712, %718 : vector<1x128xf32>
    %c62_101 = arith.constant 62 : index
    %721 = memref.load %arg1[%c62_101] : memref<112xf32, #tpu.memory_space<smem>>
    %722 = vector.broadcast %721 : f32 to vector<1x128xf32>
    %723 = arith.mulf %722, %345 : vector<1x128xf32>
    %c74_102 = arith.constant 74 : index
    %724 = memref.load %arg1[%c74_102] : memref<112xf32, #tpu.memory_space<smem>>
    %725 = vector.broadcast %724 : f32 to vector<1x128xf32>
    %726 = arith.mulf %725, %329 : vector<1x128xf32>
    %727 = arith.addf %719, %723 : vector<1x128xf32>
    %728 = arith.addf %720, %726 : vector<1x128xf32>
    %c63_103 = arith.constant 63 : index
    %729 = memref.load %arg1[%c63_103] : memref<112xf32, #tpu.memory_space<smem>>
    %730 = vector.broadcast %729 : f32 to vector<1x128xf32>
    %731 = arith.mulf %730, %346 : vector<1x128xf32>
    %c78_104 = arith.constant 78 : index
    %732 = memref.load %arg1[%c78_104] : memref<112xf32, #tpu.memory_space<smem>>
    %733 = vector.broadcast %732 : f32 to vector<1x128xf32>
    %734 = arith.mulf %733, %330 : vector<1x128xf32>
    %735 = arith.addf %727, %731 : vector<1x128xf32>
    %736 = arith.addf %728, %734 : vector<1x128xf32>
    %cst_105 = arith.constant 0.000000e+00 : f32
    %737 = vector.broadcast %cst_105 : f32 to vector<1x128xf32>
    %738 = arith.subf %737, %735 : vector<1x128xf32>
    %cst_106 = arith.constant 5.000000e-01 : f32
    %739 = vector.broadcast %cst_106 : f32 to vector<1x128xf32>
    %740 = arith.mulf %739, %21 : vector<1x128xf32>
    %741 = arith.mulf %740, %736 : vector<1x128xf32>
    %742 = arith.addf %738, %741 : vector<1x128xf32>
    %c64_107 = arith.constant 64 : index
    %743 = memref.load %arg1[%c64_107] : memref<112xf32, #tpu.memory_space<smem>>
    %744 = vector.broadcast %743 : f32 to vector<1x128xf32>
    %745 = arith.mulf %744, %331 : vector<1x128xf32>
    %c19_108 = arith.constant 19 : index
    %746 = memref.load %arg1[%c19_108] : memref<112xf32, #tpu.memory_space<smem>>
    %747 = vector.broadcast %746 : f32 to vector<1x128xf32>
    %748 = arith.mulf %747, %315 : vector<1x128xf32>
    %c65_109 = arith.constant 65 : index
    %749 = memref.load %arg1[%c65_109] : memref<112xf32, #tpu.memory_space<smem>>
    %750 = vector.broadcast %749 : f32 to vector<1x128xf32>
    %751 = arith.mulf %750, %332 : vector<1x128xf32>
    %c23_110 = arith.constant 23 : index
    %752 = memref.load %arg1[%c23_110] : memref<112xf32, #tpu.memory_space<smem>>
    %753 = vector.broadcast %752 : f32 to vector<1x128xf32>
    %754 = arith.mulf %753, %316 : vector<1x128xf32>
    %755 = arith.addf %745, %751 : vector<1x128xf32>
    %756 = arith.addf %748, %754 : vector<1x128xf32>
    %c66_111 = arith.constant 66 : index
    %757 = memref.load %arg1[%c66_111] : memref<112xf32, #tpu.memory_space<smem>>
    %758 = vector.broadcast %757 : f32 to vector<1x128xf32>
    %759 = arith.mulf %758, %333 : vector<1x128xf32>
    %c27_112 = arith.constant 27 : index
    %760 = memref.load %arg1[%c27_112] : memref<112xf32, #tpu.memory_space<smem>>
    %761 = vector.broadcast %760 : f32 to vector<1x128xf32>
    %762 = arith.mulf %761, %317 : vector<1x128xf32>
    %763 = arith.addf %755, %759 : vector<1x128xf32>
    %764 = arith.addf %756, %762 : vector<1x128xf32>
    %c67_113 = arith.constant 67 : index
    %765 = memref.load %arg1[%c67_113] : memref<112xf32, #tpu.memory_space<smem>>
    %766 = vector.broadcast %765 : f32 to vector<1x128xf32>
    %767 = arith.mulf %766, %334 : vector<1x128xf32>
    %c31_114 = arith.constant 31 : index
    %768 = memref.load %arg1[%c31_114] : memref<112xf32, #tpu.memory_space<smem>>
    %769 = vector.broadcast %768 : f32 to vector<1x128xf32>
    %770 = arith.mulf %769, %318 : vector<1x128xf32>
    %771 = arith.addf %763, %767 : vector<1x128xf32>
    %772 = arith.addf %764, %770 : vector<1x128xf32>
    %c68_115 = arith.constant 68 : index
    %773 = memref.load %arg1[%c68_115] : memref<112xf32, #tpu.memory_space<smem>>
    %774 = vector.broadcast %773 : f32 to vector<1x128xf32>
    %775 = arith.mulf %774, %335 : vector<1x128xf32>
    %c35_116 = arith.constant 35 : index
    %776 = memref.load %arg1[%c35_116] : memref<112xf32, #tpu.memory_space<smem>>
    %777 = vector.broadcast %776 : f32 to vector<1x128xf32>
    %778 = arith.mulf %777, %319 : vector<1x128xf32>
    %779 = arith.addf %771, %775 : vector<1x128xf32>
    %780 = arith.addf %772, %778 : vector<1x128xf32>
    %c69_117 = arith.constant 69 : index
    %781 = memref.load %arg1[%c69_117] : memref<112xf32, #tpu.memory_space<smem>>
    %782 = vector.broadcast %781 : f32 to vector<1x128xf32>
    %783 = arith.mulf %782, %336 : vector<1x128xf32>
    %c39_118 = arith.constant 39 : index
    %784 = memref.load %arg1[%c39_118] : memref<112xf32, #tpu.memory_space<smem>>
    %785 = vector.broadcast %784 : f32 to vector<1x128xf32>
    %786 = arith.mulf %785, %320 : vector<1x128xf32>
    %787 = arith.addf %779, %783 : vector<1x128xf32>
    %788 = arith.addf %780, %786 : vector<1x128xf32>
    %c70_119 = arith.constant 70 : index
    %789 = memref.load %arg1[%c70_119] : memref<112xf32, #tpu.memory_space<smem>>
    %790 = vector.broadcast %789 : f32 to vector<1x128xf32>
    %791 = arith.mulf %790, %337 : vector<1x128xf32>
    %c43_120 = arith.constant 43 : index
    %792 = memref.load %arg1[%c43_120] : memref<112xf32, #tpu.memory_space<smem>>
    %793 = vector.broadcast %792 : f32 to vector<1x128xf32>
    %794 = arith.mulf %793, %321 : vector<1x128xf32>
    %795 = arith.addf %787, %791 : vector<1x128xf32>
    %796 = arith.addf %788, %794 : vector<1x128xf32>
    %c71_121 = arith.constant 71 : index
    %797 = memref.load %arg1[%c71_121] : memref<112xf32, #tpu.memory_space<smem>>
    %798 = vector.broadcast %797 : f32 to vector<1x128xf32>
    %799 = arith.mulf %798, %338 : vector<1x128xf32>
    %c47_122 = arith.constant 47 : index
    %800 = memref.load %arg1[%c47_122] : memref<112xf32, #tpu.memory_space<smem>>
    %801 = vector.broadcast %800 : f32 to vector<1x128xf32>
    %802 = arith.mulf %801, %322 : vector<1x128xf32>
    %803 = arith.addf %795, %799 : vector<1x128xf32>
    %804 = arith.addf %796, %802 : vector<1x128xf32>
    %c72_123 = arith.constant 72 : index
    %805 = memref.load %arg1[%c72_123] : memref<112xf32, #tpu.memory_space<smem>>
    %806 = vector.broadcast %805 : f32 to vector<1x128xf32>
    %807 = arith.mulf %806, %339 : vector<1x128xf32>
    %c51_124 = arith.constant 51 : index
    %808 = memref.load %arg1[%c51_124] : memref<112xf32, #tpu.memory_space<smem>>
    %809 = vector.broadcast %808 : f32 to vector<1x128xf32>
    %810 = arith.mulf %809, %323 : vector<1x128xf32>
    %811 = arith.addf %803, %807 : vector<1x128xf32>
    %812 = arith.addf %804, %810 : vector<1x128xf32>
    %c73_125 = arith.constant 73 : index
    %813 = memref.load %arg1[%c73_125] : memref<112xf32, #tpu.memory_space<smem>>
    %814 = vector.broadcast %813 : f32 to vector<1x128xf32>
    %815 = arith.mulf %814, %340 : vector<1x128xf32>
    %c55_126 = arith.constant 55 : index
    %816 = memref.load %arg1[%c55_126] : memref<112xf32, #tpu.memory_space<smem>>
    %817 = vector.broadcast %816 : f32 to vector<1x128xf32>
    %818 = arith.mulf %817, %324 : vector<1x128xf32>
    %819 = arith.addf %811, %815 : vector<1x128xf32>
    %820 = arith.addf %812, %818 : vector<1x128xf32>
    %c74_127 = arith.constant 74 : index
    %821 = memref.load %arg1[%c74_127] : memref<112xf32, #tpu.memory_space<smem>>
    %822 = vector.broadcast %821 : f32 to vector<1x128xf32>
    %823 = arith.mulf %822, %341 : vector<1x128xf32>
    %c59_128 = arith.constant 59 : index
    %824 = memref.load %arg1[%c59_128] : memref<112xf32, #tpu.memory_space<smem>>
    %825 = vector.broadcast %824 : f32 to vector<1x128xf32>
    %826 = arith.mulf %825, %325 : vector<1x128xf32>
    %827 = arith.addf %819, %823 : vector<1x128xf32>
    %828 = arith.addf %820, %826 : vector<1x128xf32>
    %c75_129 = arith.constant 75 : index
    %829 = memref.load %arg1[%c75_129] : memref<112xf32, #tpu.memory_space<smem>>
    %830 = vector.broadcast %829 : f32 to vector<1x128xf32>
    %831 = arith.mulf %830, %342 : vector<1x128xf32>
    %c63_130 = arith.constant 63 : index
    %832 = memref.load %arg1[%c63_130] : memref<112xf32, #tpu.memory_space<smem>>
    %833 = vector.broadcast %832 : f32 to vector<1x128xf32>
    %834 = arith.mulf %833, %326 : vector<1x128xf32>
    %835 = arith.addf %827, %831 : vector<1x128xf32>
    %836 = arith.addf %828, %834 : vector<1x128xf32>
    %c76_131 = arith.constant 76 : index
    %837 = memref.load %arg1[%c76_131] : memref<112xf32, #tpu.memory_space<smem>>
    %838 = vector.broadcast %837 : f32 to vector<1x128xf32>
    %839 = arith.mulf %838, %343 : vector<1x128xf32>
    %c67_132 = arith.constant 67 : index
    %840 = memref.load %arg1[%c67_132] : memref<112xf32, #tpu.memory_space<smem>>
    %841 = vector.broadcast %840 : f32 to vector<1x128xf32>
    %842 = arith.mulf %841, %327 : vector<1x128xf32>
    %843 = arith.addf %835, %839 : vector<1x128xf32>
    %844 = arith.addf %836, %842 : vector<1x128xf32>
    %c77_133 = arith.constant 77 : index
    %845 = memref.load %arg1[%c77_133] : memref<112xf32, #tpu.memory_space<smem>>
    %846 = vector.broadcast %845 : f32 to vector<1x128xf32>
    %847 = arith.mulf %846, %344 : vector<1x128xf32>
    %c71_134 = arith.constant 71 : index
    %848 = memref.load %arg1[%c71_134] : memref<112xf32, #tpu.memory_space<smem>>
    %849 = vector.broadcast %848 : f32 to vector<1x128xf32>
    %850 = arith.mulf %849, %328 : vector<1x128xf32>
    %851 = arith.addf %843, %847 : vector<1x128xf32>
    %852 = arith.addf %844, %850 : vector<1x128xf32>
    %c78_135 = arith.constant 78 : index
    %853 = memref.load %arg1[%c78_135] : memref<112xf32, #tpu.memory_space<smem>>
    %854 = vector.broadcast %853 : f32 to vector<1x128xf32>
    %855 = arith.mulf %854, %345 : vector<1x128xf32>
    %c75_136 = arith.constant 75 : index
    %856 = memref.load %arg1[%c75_136] : memref<112xf32, #tpu.memory_space<smem>>
    %857 = vector.broadcast %856 : f32 to vector<1x128xf32>
    %858 = arith.mulf %857, %329 : vector<1x128xf32>
    %859 = arith.addf %851, %855 : vector<1x128xf32>
    %860 = arith.addf %852, %858 : vector<1x128xf32>
    %c79_137 = arith.constant 79 : index
    %861 = memref.load %arg1[%c79_137] : memref<112xf32, #tpu.memory_space<smem>>
    %862 = vector.broadcast %861 : f32 to vector<1x128xf32>
    %863 = arith.mulf %862, %346 : vector<1x128xf32>
    %c79_138 = arith.constant 79 : index
    %864 = memref.load %arg1[%c79_138] : memref<112xf32, #tpu.memory_space<smem>>
    %865 = vector.broadcast %864 : f32 to vector<1x128xf32>
    %866 = arith.mulf %865, %330 : vector<1x128xf32>
    %867 = arith.addf %859, %863 : vector<1x128xf32>
    %868 = arith.addf %860, %866 : vector<1x128xf32>
    %cst_139 = arith.constant 0.000000e+00 : f32
    %869 = vector.broadcast %cst_139 : f32 to vector<1x128xf32>
    %870 = arith.subf %869, %867 : vector<1x128xf32>
    %cst_140 = arith.constant 5.000000e-01 : f32
    %871 = vector.broadcast %cst_140 : f32 to vector<1x128xf32>
    %872 = arith.mulf %871, %22 : vector<1x128xf32>
    %873 = arith.mulf %872, %868 : vector<1x128xf32>
    %874 = arith.addf %870, %873 : vector<1x128xf32>
    %c80 = arith.constant 80 : index
    %875 = memref.load %arg1[%c80] : memref<112xf32, #tpu.memory_space<smem>>
    %876 = vector.broadcast %875 : f32 to vector<1x128xf32>
    %877 = arith.mulf %876, %19 : vector<1x128xf32>
    %c84 = arith.constant 84 : index
    %878 = memref.load %arg1[%c84] : memref<112xf32, #tpu.memory_space<smem>>
    %879 = vector.broadcast %878 : f32 to vector<1x128xf32>
    %880 = arith.mulf %879, %5 : vector<1x128xf32>
    %881 = arith.addf %877, %880 : vector<1x128xf32>
    %c85 = arith.constant 85 : index
    %882 = memref.load %arg1[%c85] : memref<112xf32, #tpu.memory_space<smem>>
    %883 = vector.broadcast %882 : f32 to vector<1x128xf32>
    %884 = arith.mulf %883, %6 : vector<1x128xf32>
    %885 = arith.addf %881, %884 : vector<1x128xf32>
    %c86 = arith.constant 86 : index
    %886 = memref.load %arg1[%c86] : memref<112xf32, #tpu.memory_space<smem>>
    %887 = vector.broadcast %886 : f32 to vector<1x128xf32>
    %888 = arith.mulf %887, %7 : vector<1x128xf32>
    %889 = arith.addf %885, %888 : vector<1x128xf32>
    %c87 = arith.constant 87 : index
    %890 = memref.load %arg1[%c87] : memref<112xf32, #tpu.memory_space<smem>>
    %891 = vector.broadcast %890 : f32 to vector<1x128xf32>
    %892 = arith.mulf %891, %8 : vector<1x128xf32>
    %893 = arith.addf %889, %892 : vector<1x128xf32>
    %c81 = arith.constant 81 : index
    %894 = memref.load %arg1[%c81] : memref<112xf32, #tpu.memory_space<smem>>
    %895 = vector.broadcast %894 : f32 to vector<1x128xf32>
    %896 = arith.mulf %895, %20 : vector<1x128xf32>
    %c88 = arith.constant 88 : index
    %897 = memref.load %arg1[%c88] : memref<112xf32, #tpu.memory_space<smem>>
    %898 = vector.broadcast %897 : f32 to vector<1x128xf32>
    %899 = arith.mulf %898, %5 : vector<1x128xf32>
    %900 = arith.addf %896, %899 : vector<1x128xf32>
    %c89 = arith.constant 89 : index
    %901 = memref.load %arg1[%c89] : memref<112xf32, #tpu.memory_space<smem>>
    %902 = vector.broadcast %901 : f32 to vector<1x128xf32>
    %903 = arith.mulf %902, %6 : vector<1x128xf32>
    %904 = arith.addf %900, %903 : vector<1x128xf32>
    %c90 = arith.constant 90 : index
    %905 = memref.load %arg1[%c90] : memref<112xf32, #tpu.memory_space<smem>>
    %906 = vector.broadcast %905 : f32 to vector<1x128xf32>
    %907 = arith.mulf %906, %7 : vector<1x128xf32>
    %908 = arith.addf %904, %907 : vector<1x128xf32>
    %c91 = arith.constant 91 : index
    %909 = memref.load %arg1[%c91] : memref<112xf32, #tpu.memory_space<smem>>
    %910 = vector.broadcast %909 : f32 to vector<1x128xf32>
    %911 = arith.mulf %910, %8 : vector<1x128xf32>
    %912 = arith.addf %908, %911 : vector<1x128xf32>
    %c82 = arith.constant 82 : index
    %913 = memref.load %arg1[%c82] : memref<112xf32, #tpu.memory_space<smem>>
    %914 = vector.broadcast %913 : f32 to vector<1x128xf32>
    %915 = arith.mulf %914, %21 : vector<1x128xf32>
    %c92 = arith.constant 92 : index
    %916 = memref.load %arg1[%c92] : memref<112xf32, #tpu.memory_space<smem>>
    %917 = vector.broadcast %916 : f32 to vector<1x128xf32>
    %918 = arith.mulf %917, %5 : vector<1x128xf32>
    %919 = arith.addf %915, %918 : vector<1x128xf32>
    %c93 = arith.constant 93 : index
    %920 = memref.load %arg1[%c93] : memref<112xf32, #tpu.memory_space<smem>>
    %921 = vector.broadcast %920 : f32 to vector<1x128xf32>
    %922 = arith.mulf %921, %6 : vector<1x128xf32>
    %923 = arith.addf %919, %922 : vector<1x128xf32>
    %c94 = arith.constant 94 : index
    %924 = memref.load %arg1[%c94] : memref<112xf32, #tpu.memory_space<smem>>
    %925 = vector.broadcast %924 : f32 to vector<1x128xf32>
    %926 = arith.mulf %925, %7 : vector<1x128xf32>
    %927 = arith.addf %923, %926 : vector<1x128xf32>
    %c95 = arith.constant 95 : index
    %928 = memref.load %arg1[%c95] : memref<112xf32, #tpu.memory_space<smem>>
    %929 = vector.broadcast %928 : f32 to vector<1x128xf32>
    %930 = arith.mulf %929, %8 : vector<1x128xf32>
    %931 = arith.addf %927, %930 : vector<1x128xf32>
    %c83 = arith.constant 83 : index
    %932 = memref.load %arg1[%c83] : memref<112xf32, #tpu.memory_space<smem>>
    %933 = vector.broadcast %932 : f32 to vector<1x128xf32>
    %934 = arith.mulf %933, %22 : vector<1x128xf32>
    %c96 = arith.constant 96 : index
    %935 = memref.load %arg1[%c96] : memref<112xf32, #tpu.memory_space<smem>>
    %936 = vector.broadcast %935 : f32 to vector<1x128xf32>
    %937 = arith.mulf %936, %5 : vector<1x128xf32>
    %938 = arith.addf %934, %937 : vector<1x128xf32>
    %c97 = arith.constant 97 : index
    %939 = memref.load %arg1[%c97] : memref<112xf32, #tpu.memory_space<smem>>
    %940 = vector.broadcast %939 : f32 to vector<1x128xf32>
    %941 = arith.mulf %940, %6 : vector<1x128xf32>
    %942 = arith.addf %938, %941 : vector<1x128xf32>
    %c98 = arith.constant 98 : index
    %943 = memref.load %arg1[%c98] : memref<112xf32, #tpu.memory_space<smem>>
    %944 = vector.broadcast %943 : f32 to vector<1x128xf32>
    %945 = arith.mulf %944, %7 : vector<1x128xf32>
    %946 = arith.addf %942, %945 : vector<1x128xf32>
    %c99 = arith.constant 99 : index
    %947 = memref.load %arg1[%c99] : memref<112xf32, #tpu.memory_space<smem>>
    %948 = vector.broadcast %947 : f32 to vector<1x128xf32>
    %949 = arith.mulf %948, %8 : vector<1x128xf32>
    %950 = arith.addf %946, %949 : vector<1x128xf32>
    %c100 = arith.constant 100 : index
    %951 = memref.load %arg1[%c100] : memref<112xf32, #tpu.memory_space<smem>>
    %952 = vector.broadcast %951 : f32 to vector<1x128xf32>
    %953 = arith.mulf %952, %13 : vector<1x128xf32>
    %c104 = arith.constant 104 : index
    %954 = memref.load %arg1[%c104] : memref<112xf32, #tpu.memory_space<smem>>
    %955 = vector.broadcast %954 : f32 to vector<1x128xf32>
    %956 = arith.mulf %955, %14 : vector<1x128xf32>
    %957 = arith.addf %953, %956 : vector<1x128xf32>
    %c108 = arith.constant 108 : index
    %958 = memref.load %arg1[%c108] : memref<112xf32, #tpu.memory_space<smem>>
    %959 = vector.broadcast %958 : f32 to vector<1x128xf32>
    %960 = arith.mulf %959, %9 : vector<1x128xf32>
    %961 = arith.subf %957, %960 : vector<1x128xf32>
    %962 = arith.subf %961, %478 : vector<1x128xf32>
    %963 = arith.subf %962, %893 : vector<1x128xf32>
    %c101 = arith.constant 101 : index
    %964 = memref.load %arg1[%c101] : memref<112xf32, #tpu.memory_space<smem>>
    %965 = vector.broadcast %964 : f32 to vector<1x128xf32>
    %966 = arith.mulf %965, %13 : vector<1x128xf32>
    %c105 = arith.constant 105 : index
    %967 = memref.load %arg1[%c105] : memref<112xf32, #tpu.memory_space<smem>>
    %968 = vector.broadcast %967 : f32 to vector<1x128xf32>
    %969 = arith.mulf %968, %14 : vector<1x128xf32>
    %970 = arith.addf %966, %969 : vector<1x128xf32>
    %c109 = arith.constant 109 : index
    %971 = memref.load %arg1[%c109] : memref<112xf32, #tpu.memory_space<smem>>
    %972 = vector.broadcast %971 : f32 to vector<1x128xf32>
    %973 = arith.mulf %972, %10 : vector<1x128xf32>
    %974 = arith.subf %970, %973 : vector<1x128xf32>
    %975 = arith.subf %974, %610 : vector<1x128xf32>
    %976 = arith.subf %975, %912 : vector<1x128xf32>
    %c102 = arith.constant 102 : index
    %977 = memref.load %arg1[%c102] : memref<112xf32, #tpu.memory_space<smem>>
    %978 = vector.broadcast %977 : f32 to vector<1x128xf32>
    %979 = arith.mulf %978, %13 : vector<1x128xf32>
    %c106 = arith.constant 106 : index
    %980 = memref.load %arg1[%c106] : memref<112xf32, #tpu.memory_space<smem>>
    %981 = vector.broadcast %980 : f32 to vector<1x128xf32>
    %982 = arith.mulf %981, %14 : vector<1x128xf32>
    %983 = arith.addf %979, %982 : vector<1x128xf32>
    %c110 = arith.constant 110 : index
    %984 = memref.load %arg1[%c110] : memref<112xf32, #tpu.memory_space<smem>>
    %985 = vector.broadcast %984 : f32 to vector<1x128xf32>
    %986 = arith.mulf %985, %11 : vector<1x128xf32>
    %987 = arith.subf %983, %986 : vector<1x128xf32>
    %988 = arith.subf %987, %742 : vector<1x128xf32>
    %989 = arith.subf %988, %931 : vector<1x128xf32>
    %c103 = arith.constant 103 : index
    %990 = memref.load %arg1[%c103] : memref<112xf32, #tpu.memory_space<smem>>
    %991 = vector.broadcast %990 : f32 to vector<1x128xf32>
    %992 = arith.mulf %991, %13 : vector<1x128xf32>
    %c107 = arith.constant 107 : index
    %993 = memref.load %arg1[%c107] : memref<112xf32, #tpu.memory_space<smem>>
    %994 = vector.broadcast %993 : f32 to vector<1x128xf32>
    %995 = arith.mulf %994, %14 : vector<1x128xf32>
    %996 = arith.addf %992, %995 : vector<1x128xf32>
    %c111 = arith.constant 111 : index
    %997 = memref.load %arg1[%c111] : memref<112xf32, #tpu.memory_space<smem>>
    %998 = vector.broadcast %997 : f32 to vector<1x128xf32>
    %999 = arith.mulf %998, %12 : vector<1x128xf32>
    %1000 = arith.subf %996, %999 : vector<1x128xf32>
    %1001 = arith.subf %1000, %874 : vector<1x128xf32>
    %1002 = arith.subf %1001, %950 : vector<1x128xf32>
    %1003 = tpu.reciprocal %40 {approx = true} : vector<1x128xf32> -> vector<1x128xf32>
    %1004 = arith.mulf %40, %1003 : vector<1x128xf32>
    %cst_141 = arith.constant 2.000000e+00 : f32
    %1005 = vector.broadcast %cst_141 : f32 to vector<1x128xf32>
    %1006 = arith.subf %1005, %1004 : vector<1x128xf32>
    %1007 = arith.mulf %1003, %1006 : vector<1x128xf32>
    %1008 = arith.mulf %40, %1007 : vector<1x128xf32>
    %cst_142 = arith.constant 2.000000e+00 : f32
    %1009 = vector.broadcast %cst_142 : f32 to vector<1x128xf32>
    %1010 = arith.subf %1009, %1008 : vector<1x128xf32>
    %1011 = arith.mulf %1007, %1010 : vector<1x128xf32>
    %1012 = arith.mulf %58, %1011 : vector<1x128xf32>
    %1013 = arith.mulf %76, %1011 : vector<1x128xf32>
    %1014 = arith.mulf %94, %1011 : vector<1x128xf32>
    %1015 = arith.mulf %963, %1011 : vector<1x128xf32>
    %1016 = arith.mulf %112, %1012 : vector<1x128xf32>
    %1017 = arith.subf %130, %1016 : vector<1x128xf32>
    %1018 = arith.mulf %112, %1013 : vector<1x128xf32>
    %1019 = arith.subf %148, %1018 : vector<1x128xf32>
    %1020 = arith.mulf %112, %1014 : vector<1x128xf32>
    %1021 = arith.subf %166, %1020 : vector<1x128xf32>
    %1022 = arith.mulf %112, %1015 : vector<1x128xf32>
    %1023 = arith.subf %976, %1022 : vector<1x128xf32>
    %1024 = arith.mulf %184, %1012 : vector<1x128xf32>
    %1025 = arith.subf %202, %1024 : vector<1x128xf32>
    %1026 = arith.mulf %184, %1013 : vector<1x128xf32>
    %1027 = arith.subf %220, %1026 : vector<1x128xf32>
    %1028 = arith.mulf %184, %1014 : vector<1x128xf32>
    %1029 = arith.subf %238, %1028 : vector<1x128xf32>
    %1030 = arith.mulf %184, %1015 : vector<1x128xf32>
    %1031 = arith.subf %989, %1030 : vector<1x128xf32>
    %1032 = arith.mulf %256, %1012 : vector<1x128xf32>
    %1033 = arith.subf %274, %1032 : vector<1x128xf32>
    %1034 = arith.mulf %256, %1013 : vector<1x128xf32>
    %1035 = arith.subf %292, %1034 : vector<1x128xf32>
    %1036 = arith.mulf %256, %1014 : vector<1x128xf32>
    %1037 = arith.subf %310, %1036 : vector<1x128xf32>
    %1038 = arith.mulf %256, %1015 : vector<1x128xf32>
    %1039 = arith.subf %1002, %1038 : vector<1x128xf32>
    %1040 = tpu.reciprocal %1017 {approx = true} : vector<1x128xf32> -> vector<1x128xf32>
    %1041 = arith.mulf %1017, %1040 : vector<1x128xf32>
    %cst_143 = arith.constant 2.000000e+00 : f32
    %1042 = vector.broadcast %cst_143 : f32 to vector<1x128xf32>
    %1043 = arith.subf %1042, %1041 : vector<1x128xf32>
    %1044 = arith.mulf %1040, %1043 : vector<1x128xf32>
    %1045 = arith.mulf %1017, %1044 : vector<1x128xf32>
    %cst_144 = arith.constant 2.000000e+00 : f32
    %1046 = vector.broadcast %cst_144 : f32 to vector<1x128xf32>
    %1047 = arith.subf %1046, %1045 : vector<1x128xf32>
    %1048 = arith.mulf %1044, %1047 : vector<1x128xf32>
    %1049 = arith.mulf %1019, %1048 : vector<1x128xf32>
    %1050 = arith.mulf %1021, %1048 : vector<1x128xf32>
    %1051 = arith.mulf %1023, %1048 : vector<1x128xf32>
    %1052 = arith.mulf %1012, %1049 : vector<1x128xf32>
    %1053 = arith.subf %1013, %1052 : vector<1x128xf32>
    %1054 = arith.mulf %1012, %1050 : vector<1x128xf32>
    %1055 = arith.subf %1014, %1054 : vector<1x128xf32>
    %1056 = arith.mulf %1012, %1051 : vector<1x128xf32>
    %1057 = arith.subf %1015, %1056 : vector<1x128xf32>
    %1058 = arith.mulf %1025, %1049 : vector<1x128xf32>
    %1059 = arith.subf %1027, %1058 : vector<1x128xf32>
    %1060 = arith.mulf %1025, %1050 : vector<1x128xf32>
    %1061 = arith.subf %1029, %1060 : vector<1x128xf32>
    %1062 = arith.mulf %1025, %1051 : vector<1x128xf32>
    %1063 = arith.subf %1031, %1062 : vector<1x128xf32>
    %1064 = arith.mulf %1033, %1049 : vector<1x128xf32>
    %1065 = arith.subf %1035, %1064 : vector<1x128xf32>
    %1066 = arith.mulf %1033, %1050 : vector<1x128xf32>
    %1067 = arith.subf %1037, %1066 : vector<1x128xf32>
    %1068 = arith.mulf %1033, %1051 : vector<1x128xf32>
    %1069 = arith.subf %1039, %1068 : vector<1x128xf32>
    %1070 = tpu.reciprocal %1059 {approx = true} : vector<1x128xf32> -> vector<1x128xf32>
    %1071 = arith.mulf %1059, %1070 : vector<1x128xf32>
    %cst_145 = arith.constant 2.000000e+00 : f32
    %1072 = vector.broadcast %cst_145 : f32 to vector<1x128xf32>
    %1073 = arith.subf %1072, %1071 : vector<1x128xf32>
    %1074 = arith.mulf %1070, %1073 : vector<1x128xf32>
    %1075 = arith.mulf %1059, %1074 : vector<1x128xf32>
    %cst_146 = arith.constant 2.000000e+00 : f32
    %1076 = vector.broadcast %cst_146 : f32 to vector<1x128xf32>
    %1077 = arith.subf %1076, %1075 : vector<1x128xf32>
    %1078 = arith.mulf %1074, %1077 : vector<1x128xf32>
    %1079 = arith.mulf %1061, %1078 : vector<1x128xf32>
    %1080 = arith.mulf %1063, %1078 : vector<1x128xf32>
    %1081 = arith.mulf %1053, %1079 : vector<1x128xf32>
    %1082 = arith.subf %1055, %1081 : vector<1x128xf32>
    %1083 = arith.mulf %1053, %1080 : vector<1x128xf32>
    %1084 = arith.subf %1057, %1083 : vector<1x128xf32>
    %1085 = arith.mulf %1049, %1079 : vector<1x128xf32>
    %1086 = arith.subf %1050, %1085 : vector<1x128xf32>
    %1087 = arith.mulf %1049, %1080 : vector<1x128xf32>
    %1088 = arith.subf %1051, %1087 : vector<1x128xf32>
    %1089 = arith.mulf %1065, %1079 : vector<1x128xf32>
    %1090 = arith.subf %1067, %1089 : vector<1x128xf32>
    %1091 = arith.mulf %1065, %1080 : vector<1x128xf32>
    %1092 = arith.subf %1069, %1091 : vector<1x128xf32>
    %1093 = tpu.reciprocal %1090 {approx = true} : vector<1x128xf32> -> vector<1x128xf32>
    %1094 = arith.mulf %1090, %1093 : vector<1x128xf32>
    %cst_147 = arith.constant 2.000000e+00 : f32
    %1095 = vector.broadcast %cst_147 : f32 to vector<1x128xf32>
    %1096 = arith.subf %1095, %1094 : vector<1x128xf32>
    %1097 = arith.mulf %1093, %1096 : vector<1x128xf32>
    %1098 = arith.mulf %1090, %1097 : vector<1x128xf32>
    %cst_148 = arith.constant 2.000000e+00 : f32
    %1099 = vector.broadcast %cst_148 : f32 to vector<1x128xf32>
    %1100 = arith.subf %1099, %1098 : vector<1x128xf32>
    %1101 = arith.mulf %1097, %1100 : vector<1x128xf32>
    %1102 = arith.mulf %1092, %1101 : vector<1x128xf32>
    %1103 = arith.mulf %1082, %1102 : vector<1x128xf32>
    %1104 = arith.subf %1084, %1103 : vector<1x128xf32>
    %1105 = arith.mulf %1086, %1102 : vector<1x128xf32>
    %1106 = arith.subf %1088, %1105 : vector<1x128xf32>
    %1107 = arith.mulf %1079, %1102 : vector<1x128xf32>
    %1108 = arith.subf %1080, %1107 : vector<1x128xf32>
    %c0_149 = arith.constant 0 : index
    %c0_150 = arith.constant 0 : index
    %1109 = vector.load %arg5[%c0_149, %c0_150] : memref<4x128xf32, #tpu.memory_space<vmem>>, vector<1x128xf32>
    tpu.vector_store %arg5[%c0_149, %c0_150], %1104 {strides = array<i32>} : memref<4x128xf32, #tpu.memory_space<vmem>>, vector<1x128xf32>,
    %c1_151 = arith.constant 1 : index
    %c0_152 = arith.constant 0 : index
    %1110 = vector.load %arg5[%c1_151, %c0_152] : memref<4x128xf32, #tpu.memory_space<vmem>>, vector<1x128xf32>
    tpu.vector_store %arg5[%c1_151, %c0_152], %1106 {strides = array<i32>} : memref<4x128xf32, #tpu.memory_space<vmem>>, vector<1x128xf32>,
    %c2_153 = arith.constant 2 : index
    %c0_154 = arith.constant 0 : index
    %1111 = vector.load %arg5[%c2_153, %c0_154] : memref<4x128xf32, #tpu.memory_space<vmem>>, vector<1x128xf32>
    tpu.vector_store %arg5[%c2_153, %c0_154], %1108 {strides = array<i32>} : memref<4x128xf32, #tpu.memory_space<vmem>>, vector<1x128xf32>,
    %c3_155 = arith.constant 3 : index
    %c0_156 = arith.constant 0 : index
    %1112 = vector.load %arg5[%c3_155, %c0_156] : memref<4x128xf32, #tpu.memory_space<vmem>>, vector<1x128xf32>
    tpu.vector_store %arg5[%c3_155, %c0_156], %1102 {strides = array<i32>} : memref<4x128xf32, #tpu.memory_space<vmem>>, vector<1x128xf32>,
    return
  }
  func.func @transform_0(%arg0: i32) -> i32 {
    %c0_i32 = arith.constant 0 : i32
    %c0_i32_0 = arith.constant 0 : i32
    return %c0_i32 : i32
  }
  func.func @transform_1(%arg0: i32) -> (i32, i32) {
    %c0_i32 = arith.constant 0 : i32
    %c0_i32_0 = arith.constant 0 : i32
    return %c0_i32, %arg0 : i32, i32
  }
  func.func @transform_2(%arg0: i32) -> (i32, i32) {
    %c0_i32 = arith.constant 0 : i32
    %c0_i32_0 = arith.constant 0 : i32
    return %c0_i32, %arg0 : i32, i32
  }
  func.func @transform_3(%arg0: i32) -> (i32, i32) {
    %c0_i32 = arith.constant 0 : i32
    %c0_i32_0 = arith.constant 0 : i32
    return %c0_i32, %arg0 : i32, i32
  }
  func.func @transform_4(%arg0: i32) -> (i32, i32) {
    %c0_i32 = arith.constant 0 : i32
    %c0_i32_0 = arith.constant 0 : i32
    return %c0_i32, %arg0 : i32, i32
  }
}

</mosaic_0001>

<llo_original>
// kernel: tpu_custom_call.1
$region0: #{tpu_custom_call.1}
  #allocation0 [shape = 'u32[]', space=smem, size = 0x4, offset = 0x4, fixed_abs, tag = 'smem constant byte address 0x4 - core index']
  #allocation1 [shape = 'u32[144,128]{1,0:T(1,128)}', space=vmem, size = 0x12000, scoped, tag = 'internal scratch']
  %s0 = inlined_call_operand.hbm [shape: f32[112], index: 0, kind: input, shape index: {}]
  %s1 = inlined_call_operand.hbm [shape: f32[4,128], index: 1, kind: input, shape index: {}]
  %s2 = inlined_call_operand.vmem [shape: f32[4,128], index: 2, kind: input, shape index: {}]
  %s3 = inlined_call_operand.vmem [shape: f32[2,128], index: 3, kind: input, shape index: {}]
  %s4 = inlined_call_operand.hbm [shape: f32[4,128], index: 4, kind: output, shape index: {}]
  %s5 = sld [smem:[#allocation0]]
  $region34: #{tpu_custom_call.1} parent=0
    _
  %s7 = ssub.s32 1, %s5
  %s8 = scalar_select 0, %s7, %s5
  $region1: #{tpu_custom_call.1} parent=0
    #allocation2 [shape = 'u8[512]{0}', space=smem, size = 0x200, scoped, tag = 'input window, operand 0, single buffered']
    #allocation3 [shape = 's32[1]{0}', space=sflag, size = 0x4, scoped, tag = 'scoped memory for tpu_custom_call.1']
    #allocation4 [shape = 's32[1]{0}', space=sflag, size = 0x4, scoped, tag = 'scoped memory for tpu_custom_call.1']
    #allocation5 [shape = 's32[1]{0}', space=sflag, size = 0x4, scoped, tag = 'scoped memory for tpu_custom_call.1']
    #allocation6 [shape = 'u8[2048]{0}', space=vmem, size = 0x800, scoped, tag = 'input window, operand 1, single buffered']
    #allocation7 [shape = 'u8[2048]{0}', space=vmem, size = 0x800, scoped, tag = 'output window, operand 0, single buffered']
    %9 = vsyncpa [#allocation5], 0
    %10 = vsyncpa [#allocation3], 0
    %11 = vsyncpa [#allocation4], 0
    // Predicated region
    $region2: #{tpu_custom_call.1} parent=1 // pred_check
      _
    $region3: #{tpu_custom_call.1} parent=1 // pred_check_branch
      %13 = sbr.rel (0) target = $region5
    $region4: #{tpu_custom_call.1} parent=1 // pred_region
      %s15 = ssub.s32 16, 16
      %16 = vsyncadd [#allocation5], %s15
      %19 = dma.hbm_to_smem %s0, 16, [#allocation2], [#allocation5]
    $region5: #{tpu_custom_call.1} parent=1 // pred_fallthru
      _
    // Predicated region
    $region6: #{tpu_custom_call.1} parent=1 // pred_check
      _
    $region7: #{tpu_custom_call.1} parent=1 // pred_check_branch
      %21 = sbr.rel (0) target = $region9
    $region8: #{tpu_custom_call.1} parent=1 // pred_region
      %s23 = ssub.s32 64, 64
      %24 = vsyncadd [#allocation3], %s23
      %s26 = sshll.u32 [#allocation6], 4
      %s27 = int_to_ptr.vmem [resolvable:$true] %s26
      %29 = dma.hbm_to_vmem [thread:$0]  %s1, 64, %s27, [#allocation3]
    $region9: #{tpu_custom_call.1} parent=1 // pred_fallthru
      _
    // Predicated region
    $region10: #{tpu_custom_call.1} parent=1 // pred_check
      _
    $region11: #{tpu_custom_call.1} parent=1 // pred_check_branch
      %31 = sbr.rel (0) target = $region13
    $region12: #{tpu_custom_call.1} parent=1 // pred_region
      _
    $region13: #{tpu_custom_call.1} parent=1 // pred_fallthru
      _
    // Predicated region
    $region14: #{tpu_custom_call.1} parent=1 // pred_check
      _
    $region15: #{tpu_custom_call.1} parent=1 // pred_check_branch
      %33 = sbr.rel (0) target = $region17
    $region16: #{tpu_custom_call.1} parent=1 // pred_region
      _
    $region17: #{tpu_custom_call.1} parent=1 // pred_fallthru
      _
    // Predicated region
    $region18: #{tpu_custom_call.1} parent=1 // pred_check
      _
    $region19: #{tpu_custom_call.1} parent=1 // pred_check_branch
      %35 = sbr.rel (0) target = $region21
    $region20: #{tpu_custom_call.1} parent=1 // pred_region
      %36 = dma.done [#allocation5], 16
    $region21: #{tpu_custom_call.1} parent=1 // pred_fallthru
      _
    // Predicated region
    $region22: #{tpu_custom_call.1} parent=1 // pred_check
      _
    $region23: #{tpu_custom_call.1} parent=1 // pred_check_branch
      %38 = sbr.rel (0) target = $region25
    $region24: #{tpu_custom_call.1} parent=1 // pred_region
      %39 = dma.done [#allocation3], 64
    $region25: #{tpu_custom_call.1} parent=1 // pred_fallthru
      _
    %40 = sfence
    %v41 = vld [vmem:[#allocation6] sm:$0xf]
    %v42 = vld [vmem:[%s2] sm:$0xf]
    %v43 = vld [vmem:[%s3] sm:$0x3]
    %v44 = vand.u32 2147483647, %v41
    %vm45 = vcmp.le.f32.partialorder %v44, 0.7853982
    %vm46 = vcmp.lt.s32.totalorder %v41, 0
    %v47 = vand.u32 %v41, 2139095040
    %v48 = vshrl.u32 %v47, 23
    %v49 = vsub.s32 %v48, 127
    %v50 = vand.u32 2147483647, %v41
    %v51 = vand.u32 %v50, 8388607
    %v52 = vor.u32 %v51, 8388608
    %v53 = vsub.s32 0, %v52
    %v54 = vadd.s32 %v49, 1
    %vm55 = vcmp.gt.s32.totalorder %v54, 0
    %v56 = vsel %vm55, %v54, 0
    %v57 = vshrl.u32 %v56, 5
    %v58 = vand.u32 %v56, 31
    %v59 = vsub.s32 32, %v58
    %v60 = vshrl.u32 683565275, %v59
    %v61 = vshll.u32 683565275, %v58
    %v62 = vshrl.u32 2475754826, %v59
    %v63 = vor.u32 %v61, %v62
    %v64 = vshll.u32 2475754826, %v58
    %v65 = vshrl.u32 2131351028, %v59
    %v66 = vor.u32 %v64, %v65
    %v67 = vshll.u32 2131351028, %v58
    %v68 = vshrl.u32 2102212464, %v59
    %v69 = vor.u32 %v67, %v68
    %v70 = vshll.u32 2102212464, %v58
    %v71 = vshrl.u32 920167782, %v59
    %v72 = vor.u32 %v70, %v71
    %v73 = vshll.u32 920167782, %v58
    %v74 = vshrl.u32 1326507024, %v59
    %v75 = vor.u32 %v73, %v74
    %vm76 = vcmp.lt.s32.totalorder %v57, 1
    %vm77 = vcmp.lt.s32.totalorder %v57, 2
    %vm78 = vcmp.lt.s32.totalorder %v57, 3
    %vm79 = vcmp.lt.s32.totalorder %v57, 4
    %v80 = vsel %vm76, %v60, %v63
    %v81 = vsel %vm79, %v69, 2102212464
    %v82 = vsel %vm78, %v66, %v81
    %v83 = vsel %vm77, %v80, %v82
    %v84 = vsel %vm76, %v63, %v66
    %v85 = vsel %vm79, %v72, 920167782
    %v86 = vsel %vm78, %v69, %v85
    %v87 = vsel %vm77, %v84, %v86
    %v88 = vsel %vm76, %v66, %v69
    %v89 = vsel %vm79, %v75, 1326507024
    %v90 = vsel %vm78, %v72, %v89
    %v91 = vsel %vm77, %v88, %v90
    %v92 = vshll.u32 %v52, 8
    %v93 = vmul.u32.u64.compose %v92, %v91
    %v94 = vextract.low.u32 %v93
    %v95 = vextract.high.u32 %v93
    %v96 = vmul.u32.u64.compose %v92, %v87
    %v97 = vextract.low.u32 %v96
    %v98 = vextract.high.u32 %v96
    %v99 = vmul.u32 %v92, %v83
    %v100 = vadd.s32 %v95, %v97
    %vm101 = vc.u32 %v95, %v97
    %v102 = vadd.s32 %v98, 1
    %v103 = vsel %vm101, %v102, %v98
    %v104 = vadd.s32 %v99, %v103
    %v105 = vadd.s32 %v104, 536870912
    %v106 = vshrl.u32 %v105, 30
    %v107 = vshll.u32 %v106, 30
    %v108 = vsub.s32 %v104, %v107
    %vm109 = vcmp.lt.s32.totalorder %v108, 0
    %v110 = vsub.s32 0, %v108
    %v111 = vsel %vm109, %v110, %v108
    %v112 = vclz %v111
    %v113 = vsub.s32 %v112, 2
    %vm114 = vcmp.gt.s32.totalorder 0, %v113
    %v115 = vsel %vm114, 0, %v113
    %v116 = vsub.s32 32, %v115
    %v117 = vshll.u32 %v108, %v115
    %v118 = vshrl.u32 %v100, %v116
    %v119 = vor.u32 %v117, %v118
    %v120 = vsub.s32 4294967266, %v115
    %v121 = vadd.s32 %v120, 127
    %v122 = vshll.u32 %v121, 23
    %v123 = vor.u32 4788187, %v122
    %v124 = vand.u32 2147483647, %v123
    %v126 = vcvt.s32.f32 %v119
    %v127 = vmul.f32 %v126, %v124
    %v128 = vxor.u32 %v127, 2147483648
    %v129 = vsel %vm46, %v128, %v127
    %v130 = vsub.s32 4, %v106
    %v131 = vsel %vm46, %v130, %v106
    %v132 = vsel %vm45, %v41, %v129
    %v133 = vsel %vm45, 0, %v131
    %v134 = vcosq.f32.pop %v132
    %v135 = vsinq.f32.pop %v132
    %vm136 = vweird.f32 %v41
    %v137 = vand.u32 %v133, 3
    %vm138 = vcmp.lt.s32.totalorder %v137, 2
    %vm139 = vcmp.eq.s32.totalorder %v137, 0
    %v140 = vxor.u32 %v135, 2147483648
    %v141 = vsel %vm139, %v134, %v140
    %vm142 = vcmp.eq.s32.totalorder %v137, 2
    %v143 = vxor.u32 %v134, 2147483648
    %v144 = vsel %vm142, %v143, %v135
    %v145 = vsel %vm138, %v141, %v144
    %v146 = vsel %vm136, nan, %v145
    %v147 = vand.u32 2147483647, %v41
    %vm148 = vcmp.le.f32.partialorder %v147, 0.7853982
    %vm149 = vcmp.lt.s32.totalorder %v41, 0
    %v150 = vand.u32 %v41, 2139095040
    %v151 = vshrl.u32 %v150, 23
    %v152 = vsub.s32 %v151, 127
    %v153 = vand.u32 2147483647, %v41
    %v154 = vand.u32 %v153, 8388607
    %v155 = vor.u32 %v154, 8388608
    %v156 = vsub.s32 0, %v155
    %v157 = vadd.s32 %v152, 1
    %vm158 = vcmp.gt.s32.totalorder %v157, 0
    %v159 = vsel %vm158, %v157, 0
    %v160 = vshrl.u32 %v159, 5
    %v161 = vand.u32 %v159, 31
    %v162 = vsub.s32 32, %v161
    %v163 = vshrl.u32 683565275, %v162
    %v164 = vshll.u32 683565275, %v161
    %v165 = vshrl.u32 2475754826, %v162
    %v166 = vor.u32 %v164, %v165
    %v167 = vshll.u32 2475754826, %v161
    %v168 = vshrl.u32 2131351028, %v162
    %v169 = vor.u32 %v167, %v168
    %v170 = vshll.u32 2131351028, %v161
    %v171 = vshrl.u32 2102212464, %v162
    %v172 = vor.u32 %v170, %v171
    %v173 = vshll.u32 2102212464, %v161
    %v174 = vshrl.u32 920167782, %v162
    %v175 = vor.u32 %v173, %v174
    %v176 = vshll.u32 920167782, %v161
    %v177 = vshrl.u32 1326507024, %v162
    %v178 = vor.u32 %v176, %v177
    %vm179 = vcmp.lt.s32.totalorder %v160, 1
    %vm180 = vcmp.lt.s32.totalorder %v160, 2
    %vm181 = vcmp.lt.s32.totalorder %v160, 3
    %vm182 = vcmp.lt.s32.totalorder %v160, 4
    %v183 = vsel %vm179, %v163, %v166
    %v184 = vsel %vm182, %v172, 2102212464
    %v185 = vsel %vm181, %v169, %v184
    %v186 = vsel %vm180, %v183, %v185
    %v187 = vsel %vm179, %v166, %v169
    %v188 = vsel %vm182, %v175, 920167782
    %v189 = vsel %vm181, %v172, %v188
    %v190 = vsel %vm180, %v187, %v189
    %v191 = vsel %vm179, %v169, %v172
    %v192 = vsel %vm182, %v178, 1326507024
    %v193 = vsel %vm181, %v175, %v192
    %v194 = vsel %vm180, %v191, %v193
    %v195 = vshll.u32 %v155, 8
    %v196 = vmul.u32.u64.compose %v195, %v194
    %v197 = vextract.low.u32 %v196
    %v198 = vextract.high.u32 %v196
    %v199 = vmul.u32.u64.compose %v195, %v190
    %v200 = vextract.low.u32 %v199
    %v201 = vextract.high.u32 %v199
    %v202 = vmul.u32 %v195, %v186
    %v203 = vadd.s32 %v198, %v200
    %vm204 = vc.u32 %v198, %v200
    %v205 = vadd.s32 %v201, 1
    %v206 = vsel %vm204, %v205, %v201
    %v207 = vadd.s32 %v202, %v206
    %v208 = vadd.s32 %v207, 536870912
    %v209 = vshrl.u32 %v208, 30
    %v210 = vshll.u32 %v209, 30
    %v211 = vsub.s32 %v207, %v210
    %vm212 = vcmp.lt.s32.totalorder %v211, 0
    %v213 = vsub.s32 0, %v211
    %v214 = vsel %vm212, %v213, %v211
    %v215 = vclz %v214
    %v216 = vsub.s32 %v215, 2
    %vm217 = vcmp.gt.s32.totalorder 0, %v216
    %v218 = vsel %vm217, 0, %v216
    %v219 = vsub.s32 32, %v218
    %v220 = vshll.u32 %v211, %v218
    %v221 = vshrl.u32 %v203, %v219
    %v222 = vor.u32 %v220, %v221
    %v223 = vsub.s32 4294967266, %v218
    %v224 = vadd.s32 %v223, 127
    %v225 = vshll.u32 %v224, 23
    %v226 = vor.u32 4788187, %v225
    %v227 = vand.u32 2147483647, %v226
    %v229 = vcvt.s32.f32 %v222
    %v230 = vmul.f32 %v229, %v227
    %v231 = vxor.u32 %v230, 2147483648
    %v232 = vsel %vm149, %v231, %v230
    %v233 = vsub.s32 4, %v209
    %v234 = vsel %vm149, %v233, %v209
    %v235 = vsel %vm148, %v41, %v232
    %v236 = vsel %vm148, 0, %v234
    %v237 = vcosq.f32.pop %v235
    %v238 = vsinq.f32.pop %v235
    %vm239 = vweird.f32 %v41
    %v240 = vadd.s32 %v236, 3
    %v241 = vand.u32 %v240, 3
    %vm242 = vcmp.lt.s32.totalorder %v241, 2
    %vm243 = vcmp.eq.s32.totalorder %v241, 0
    %v244 = vxor.u32 %v238, 2147483648
    %v245 = vsel %vm243, %v237, %v244
    %vm246 = vcmp.eq.s32.totalorder %v241, 2
    %v247 = vxor.u32 %v237, 2147483648
    %v248 = vsel %vm246, %v247, %v238
    %v249 = vsel %vm242, %v245, %v248
    %v250 = vsel %vm239, nan, %v249
    %s251 = sld [smem:[#allocation2 + $0x10]]
    %v252 = vstv %s251
    %v253 = vmul.f32 %v252, %v146
    %s254 = sld [smem:[#allocation2 + $0x11]]
    %v255 = vstv %s254
    %v256 = vmul.f32 %v255, %v146
    %v258 = vrot.slane %v256, 1
    %v260 = vadd.f32 %v253, %v258
    %s261 = sld [smem:[#allocation2 + $0x12]]
    %v262 = vstv %s261
    %v263 = vmul.f32 %v262, %v146
    %v265 = vrot.slane %v263, 2
    %v267 = vadd.f32 %v260, %v265
    %s268 = sld [smem:[#allocation2 + $0x13]]
    %v269 = vstv %s268
    %v270 = vmul.f32 %v269, %v146
    %v272 = vrot.slane %v270, 3
    %v274 = vadd.f32 %v267, %v272
    %s275 = sld [smem:[#allocation2]]
    %v276 = vstv %s275
    %v277 = vadd.f32 %v274, %v276
    %s278 = sld [smem:[#allocation2 + $0x14]]
    %v279 = vstv %s278
    %v280 = vmul.f32 %v279, %v146
    %s281 = sld [smem:[#allocation2 + $0x15]]
    %v282 = vstv %s281
    %v283 = vmul.f32 %v282, %v146
    %v285 = vrot.slane %v283, 1
    %v287 = vadd.f32 %v280, %v285
    %s288 = sld [smem:[#allocation2 + $0x16]]
    %v289 = vstv %s288
    %v290 = vmul.f32 %v289, %v146
    %v292 = vrot.slane %v290, 2
    %v294 = vadd.f32 %v287, %v292
    %s295 = sld [smem:[#allocation2 + $0x17]]
    %v296 = vstv %s295
    %v297 = vmul.f32 %v296, %v146
    %v299 = vrot.slane %v297, 3
    %v301 = vadd.f32 %v294, %v299
    %s302 = sld [smem:[#allocation2 + $0x1]]
    %v303 = vstv %s302
    %v304 = vadd.f32 %v301, %v303
    %s305 = sld [smem:[#allocation2 + $0x18]]
    %v306 = vstv %s305
    %v307 = vmul.f32 %v306, %v146
    %s308 = sld [smem:[#allocation2 + $0x19]]
    %v309 = vstv %s308
    %v310 = vmul.f32 %v309, %v146
    %v312 = vrot.slane %v310, 1
    %v314 = vadd.f32 %v307, %v312
    %s315 = sld [smem:[#allocation2 + $0x1a]]
    %v316 = vstv %s315
    %v317 = vmul.f32 %v316, %v146
    %v319 = vrot.slane %v317, 2
    %v321 = vadd.f32 %v314, %v319
    %s322 = sld [smem:[#allocation2 + $0x1b]]
    %v323 = vstv %s322
    %v324 = vmul.f32 %v323, %v146
    %v326 = vrot.slane %v324, 3
    %v328 = vadd.f32 %v321, %v326
    %s329 = sld [smem:[#allocation2 + $0x2]]
    %v330 = vstv %s329
    %v331 = vadd.f32 %v328, %v330
    %s332 = sld [smem:[#allocation2 + $0x1c]]
    %v333 = vstv %s332
    %v334 = vmul.f32 %v333, %v146
    %s335 = sld [smem:[#allocation2 + $0x1d]]
    %v336 = vstv %s335
    %v337 = vmul.f32 %v336, %v146
    %v339 = vrot.slane %v337, 1
    %v341 = vadd.f32 %v334, %v339
    %s342 = sld [smem:[#allocation2 + $0x1e]]
    %v343 = vstv %s342
    %v344 = vmul.f32 %v343, %v146
    %v346 = vrot.slane %v344, 2
    %v348 = vadd.f32 %v341, %v346
    %s349 = sld [smem:[#allocation2 + $0x1f]]
    %v350 = vstv %s349
    %v351 = vmul.f32 %v350, %v146
    %v353 = vrot.slane %v351, 3
    %v355 = vadd.f32 %v348, %v353
    %s356 = sld [smem:[#allocation2 + $0x3]]
    %v357 = vstv %s356
    %v358 = vadd.f32 %v355, %v357
    %s359 = sld [smem:[#allocation2 + $0x20]]
    %v360 = vstv %s359
    %v361 = vmul.f32 %v360, %v146
    %s362 = sld [smem:[#allocation2 + $0x21]]
    %v363 = vstv %s362
    %v364 = vmul.f32 %v363, %v146
    %v366 = vrot.slane %v364, 1
    %v368 = vadd.f32 %v361, %v366
    %s369 = sld [smem:[#allocation2 + $0x22]]
    %v370 = vstv %s369
    %v371 = vmul.f32 %v370, %v146
    %v373 = vrot.slane %v371, 2
    %v375 = vadd.f32 %v368, %v373
    %s376 = sld [smem:[#allocation2 + $0x23]]
    %v377 = vstv %s376
    %v378 = vmul.f32 %v377, %v146
    %v380 = vrot.slane %v378, 3
    %v382 = vadd.f32 %v375, %v380
    %s383 = sld [smem:[#allocation2 + $0x4]]
    %v384 = vstv %s383
    %v385 = vadd.f32 %v382, %v384
    %s386 = sld [smem:[#allocation2 + $0x24]]
    %v387 = vstv %s386
    %v388 = vmul.f32 %v387, %v146
    %s389 = sld [smem:[#allocation2 + $0x25]]
    %v390 = vstv %s389
    %v391 = vmul.f32 %v390, %v146
    %v393 = vrot.slane %v391, 1
    %v395 = vadd.f32 %v388, %v393
    %s396 = sld [smem:[#allocation2 + $0x26]]
    %v397 = vstv %s396
    %v398 = vmul.f32 %v397, %v146
    %v400 = vrot.slane %v398, 2
    %v402 = vadd.f32 %v395, %v400
    %s403 = sld [smem:[#allocation2 + $0x27]]
    %v404 = vstv %s403
    %v405 = vmul.f32 %v404, %v146
    %v407 = vrot.slane %v405, 3
    %v409 = vadd.f32 %v402, %v407
    %s410 = sld [smem:[#allocation2 + $0x5]]
    %v411 = vstv %s410
    %v412 = vadd.f32 %v409, %v411
    %s413 = sld [smem:[#allocation2 + $0x28]]
    %v414 = vstv %s413
    %v415 = vmul.f32 %v414, %v146
    %s416 = sld [smem:[#allocation2 + $0x29]]
    %v417 = vstv %s416
    %v418 = vmul.f32 %v417, %v146
    %v420 = vrot.slane %v418, 1
    %v422 = vadd.f32 %v415, %v420
    %s423 = sld [smem:[#allocation2 + $0x2a]]
    %v424 = vstv %s423
    %v425 = vmul.f32 %v424, %v146
    %v427 = vrot.slane %v425, 2
    %v429 = vadd.f32 %v422, %v427
    %s430 = sld [smem:[#allocation2 + $0x2b]]
    %v431 = vstv %s430
    %v432 = vmul.f32 %v431, %v146
    %v434 = vrot.slane %v432, 3
    %v436 = vadd.f32 %v429, %v434
    %s437 = sld [smem:[#allocation2 + $0x6]]
    %v438 = vstv %s437
    %v439 = vadd.f32 %v436, %v438
    %s440 = sld [smem:[#allocation2 + $0x2c]]
    %v441 = vstv %s440
    %v442 = vmul.f32 %v441, %v146
    %s443 = sld [smem:[#allocation2 + $0x2d]]
    %v444 = vstv %s443
    %v445 = vmul.f32 %v444, %v146
    %v447 = vrot.slane %v445, 1
    %v449 = vadd.f32 %v442, %v447
    %s450 = sld [smem:[#allocation2 + $0x2e]]
    %v451 = vstv %s450
    %v452 = vmul.f32 %v451, %v146
    %v454 = vrot.slane %v452, 2
    %v456 = vadd.f32 %v449, %v454
    %s457 = sld [smem:[#allocation2 + $0x2f]]
    %v458 = vstv %s457
    %v459 = vmul.f32 %v458, %v146
    %v461 = vrot.slane %v459, 3
    %v463 = vadd.f32 %v456, %v461
    %s464 = sld [smem:[#allocation2 + $0x7]]
    %v465 = vstv %s464
    %v466 = vadd.f32 %v463, %v465
    %s467 = sld [smem:[#allocation2 + $0x30]]
    %v468 = vstv %s467
    %v469 = vmul.f32 %v468, %v146
    %s470 = sld [smem:[#allocation2 + $0x31]]
    %v471 = vstv %s470
    %v472 = vmul.f32 %v471, %v146
    %v474 = vrot.slane %v472, 1
    %v476 = vadd.f32 %v469, %v474
    %s477 = sld [smem:[#allocation2 + $0x32]]
    %v478 = vstv %s477
    %v479 = vmul.f32 %v478, %v146
    %v481 = vrot.slane %v479, 2
    %v483 = vadd.f32 %v476, %v481
    %s484 = sld [smem:[#allocation2 + $0x33]]
    %v485 = vstv %s484
    %v486 = vmul.f32 %v485, %v146
    %v488 = vrot.slane %v486, 3
    %v490 = vadd.f32 %v483, %v488
    %s491 = sld [smem:[#allocation2 + $0x8]]
    %v492 = vstv %s491
    %v493 = vadd.f32 %v490, %v492
    %s494 = sld [smem:[#allocation2 + $0x34]]
    %v495 = vstv %s494
    %v496 = vmul.f32 %v495, %v146
    %s497 = sld [smem:[#allocation2 + $0x35]]
    %v498 = vstv %s497
    %v499 = vmul.f32 %v498, %v146
    %v501 = vrot.slane %v499, 1
    %v503 = vadd.f32 %v496, %v501
    %s504 = sld [smem:[#allocation2 + $0x36]]
    %v505 = vstv %s504
    %v506 = vmul.f32 %v505, %v146
    %v508 = vrot.slane %v506, 2
    %v510 = vadd.f32 %v503, %v508
    %s511 = sld [smem:[#allocation2 + $0x37]]
    %v512 = vstv %s511
    %v513 = vmul.f32 %v512, %v146
    %v515 = vrot.slane %v513, 3
    %v517 = vadd.f32 %v510, %v515
    %s518 = sld [smem:[#allocation2 + $0x9]]
    %v519 = vstv %s518
    %v520 = vadd.f32 %v517, %v519
    %s521 = sld [smem:[#allocation2 + $0x38]]
    %v522 = vstv %s521
    %v523 = vmul.f32 %v522, %v146
    %s524 = sld [smem:[#allocation2 + $0x39]]
    %v525 = vstv %s524
    %v526 = vmul.f32 %v525, %v146
    %v528 = vrot.slane %v526, 1
    %v530 = vadd.f32 %v523, %v528
    %s531 = sld [smem:[#allocation2 + $0x3a]]
    %v532 = vstv %s531
    %v533 = vmul.f32 %v532, %v146
    %v535 = vrot.slane %v533, 2
    %v537 = vadd.f32 %v530, %v535
    %s538 = sld [smem:[#allocation2 + $0x3b]]
    %v539 = vstv %s538
    %v540 = vmul.f32 %v539, %v146
    %v542 = vrot.slane %v540, 3
    %v544 = vadd.f32 %v537, %v542
    %s545 = sld [smem:[#allocation2 + $0xa]]
    %v546 = vstv %s545
    %v547 = vadd.f32 %v544, %v546
    %s548 = sld [smem:[#allocation2 + $0x3c]]
    %v549 = vstv %s548
    %v550 = vmul.f32 %v549, %v146
    %s551 = sld [smem:[#allocation2 + $0x3d]]
    %v552 = vstv %s551
    %v553 = vmul.f32 %v552, %v146
    %v555 = vrot.slane %v553, 1
    %v557 = vadd.f32 %v550, %v555
    %s558 = sld [smem:[#allocation2 + $0x3e]]
    %v559 = vstv %s558
    %v560 = vmul.f32 %v559, %v146
    %v562 = vrot.slane %v560, 2
    %v564 = vadd.f32 %v557, %v562
    %s565 = sld [smem:[#allocation2 + $0x3f]]
    %v566 = vstv %s565
    %v567 = vmul.f32 %v566, %v146
    %v569 = vrot.slane %v567, 3
    %v571 = vadd.f32 %v564, %v569
    %s572 = sld [smem:[#allocation2 + $0xb]]
    %v573 = vstv %s572
    %v574 = vadd.f32 %v571, %v573
    %s575 = sld [smem:[#allocation2 + $0x40]]
    %v576 = vstv %s575
    %v577 = vmul.f32 %v576, %v146
    %s578 = sld [smem:[#allocation2 + $0x41]]
    %v579 = vstv %s578
    %v580 = vmul.f32 %v579, %v146
    %v582 = vrot.slane %v580, 1
    %v584 = vadd.f32 %v577, %v582
    %s585 = sld [smem:[#allocation2 + $0x42]]
    %v586 = vstv %s585
    %v587 = vmul.f32 %v586, %v146
    %v589 = vrot.slane %v587, 2
    %v591 = vadd.f32 %v584, %v589
    %s592 = sld [smem:[#allocation2 + $0x43]]
    %v593 = vstv %s592
    %v594 = vmul.f32 %v593, %v146
    %v596 = vrot.slane %v594, 3
    %v598 = vadd.f32 %v591, %v596
    %s599 = sld [smem:[#allocation2 + $0xc]]
    %v600 = vstv %s599
    %v601 = vadd.f32 %v598, %v600
    %s602 = sld [smem:[#allocation2 + $0x44]]
    %v603 = vstv %s602
    %v604 = vmul.f32 %v603, %v146
    %s605 = sld [smem:[#allocation2 + $0x45]]
    %v606 = vstv %s605
    %v607 = vmul.f32 %v606, %v146
    %v609 = vrot.slane %v607, 1
    %v611 = vadd.f32 %v604, %v609
    %s612 = sld [smem:[#allocation2 + $0x46]]
    %v613 = vstv %s612
    %v614 = vmul.f32 %v613, %v146
    %v616 = vrot.slane %v614, 2
    %v618 = vadd.f32 %v611, %v616
    %s619 = sld [smem:[#allocation2 + $0x47]]
    %v620 = vstv %s619
    %v621 = vmul.f32 %v620, %v146
    %v623 = vrot.slane %v621, 3
    %v625 = vadd.f32 %v618, %v623
    %s626 = sld [smem:[#allocation2 + $0xd]]
    %v627 = vstv %s626
    %v628 = vadd.f32 %v625, %v627
    %s629 = sld [smem:[#allocation2 + $0x48]]
    %v630 = vstv %s629
    %v631 = vmul.f32 %v630, %v146
    %s632 = sld [smem:[#allocation2 + $0x49]]
    %v633 = vstv %s632
    %v634 = vmul.f32 %v633, %v146
    %v636 = vrot.slane %v634, 1
    %v638 = vadd.f32 %v631, %v636
    %s639 = sld [smem:[#allocation2 + $0x4a]]
    %v640 = vstv %s639
    %v641 = vmul.f32 %v640, %v146
    %v643 = vrot.slane %v641, 2
    %v645 = vadd.f32 %v638, %v643
    %s646 = sld [smem:[#allocation2 + $0x4b]]
    %v647 = vstv %s646
    %v648 = vmul.f32 %v647, %v146
    %v650 = vrot.slane %v648, 3
    %v652 = vadd.f32 %v645, %v650
    %s653 = sld [smem:[#allocation2 + $0xe]]
    %v654 = vstv %s653
    %v655 = vadd.f32 %v652, %v654
    %s656 = sld [smem:[#allocation2 + $0x4c]]
    %v657 = vstv %s656
    %v658 = vmul.f32 %v657, %v146
    %s659 = sld [smem:[#allocation2 + $0x4d]]
    %v660 = vstv %s659
    %v661 = vmul.f32 %v660, %v146
    %v663 = vrot.slane %v661, 1
    %v665 = vadd.f32 %v658, %v663
    %s666 = sld [smem:[#allocation2 + $0x4e]]
    %v667 = vstv %s666
    %v668 = vmul.f32 %v667, %v146
    %v670 = vrot.slane %v668, 2
    %v672 = vadd.f32 %v665, %v670
    %s673 = sld [smem:[#allocation2 + $0x4f]]
    %v674 = vstv %s673
    %v675 = vmul.f32 %v674, %v146
    %v677 = vrot.slane %v675, 3
    %v679 = vadd.f32 %v672, %v677
    %s680 = sld [smem:[#allocation2 + $0xf]]
    %v681 = vstv %s680
    %v682 = vadd.f32 %v679, %v681
    %v683 = vmul.f32 %v42, %v250
    %v684 = vmul.f32 %v42, %v42
    %v686 = vrot.slane %v42, 1
    %v688 = vmul.f32 %v42, %v686
    %v689 = vrot.slane %v42, 2
    %v691 = vmul.f32 %v42, %v689
    %v692 = vrot.slane %v42, 3
    %v694 = vmul.f32 %v42, %v692
    %v695 = vmul.f32 %v42, %v683
    %v697 = vrot.slane %v683, 1
    %v699 = vmul.f32 %v42, %v697
    %v700 = vrot.slane %v683, 2
    %v702 = vmul.f32 %v42, %v700
    %v703 = vrot.slane %v683, 3
    %v705 = vmul.f32 %v42, %v703
    %v706 = vrot.slane %v683, 7
    %v708 = vmul.f32 %v42, %v706
    %v709 = vrot.slane %v683, 6
    %v711 = vmul.f32 %v42, %v709
    %v712 = vrot.slane %v683, 5
    %v714 = vmul.f32 %v42, %v712
    %v715 = vmul.f32 %v252, %v695
    %v716 = vmul.f32 %v252, %v684
    %v717 = vmul.f32 %v255, %v699
    %v718 = vmul.f32 %v279, %v688
    %v719 = vadd.f32 %v715, %v717
    %v720 = vadd.f32 %v716, %v718
    %v721 = vmul.f32 %v262, %v702
    %v722 = vmul.f32 %v306, %v691
    %v723 = vadd.f32 %v719, %v721
    %v724 = vadd.f32 %v720, %v722
    %v725 = vmul.f32 %v269, %v705
    %v726 = vmul.f32 %v333, %v694
    %v727 = vadd.f32 %v723, %v725
    %v728 = vadd.f32 %v724, %v726
    %v729 = vmul.f32 %v279, %v708
    %v730 = vmul.f32 %v360, %v688
    %v732 = vrot.slane %v729, 1
    %v734 = vadd.f32 %v727, %v732
    %v735 = vadd.f32 %v728, %v730
    %v736 = vmul.f32 %v282, %v695
    %v737 = vmul.f32 %v387, %v684
    %v739 = vrot.slane %v736, 1
    %v741 = vadd.f32 %v734, %v739
    %v743 = vrot.slane %v737, 1
    %v745 = vadd.f32 %v735, %v743
    %v746 = vmul.f32 %v289, %v699
    %v747 = vmul.f32 %v414, %v688
    %v749 = vrot.slane %v746, 1
    %v751 = vadd.f32 %v741, %v749
    %v753 = vrot.slane %v747, 1
    %v755 = vadd.f32 %v745, %v753
    %v756 = vmul.f32 %v296, %v702
    %v757 = vmul.f32 %v441, %v691
    %v759 = vrot.slane %v756, 1
    %v761 = vadd.f32 %v751, %v759
    %v763 = vrot.slane %v757, 1
    %v765 = vadd.f32 %v755, %v763
    %v766 = vmul.f32 %v306, %v711
    %v767 = vmul.f32 %v468, %v691
    %v769 = vrot.slane %v766, 2
    %v771 = vadd.f32 %v761, %v769
    %v772 = vadd.f32 %v765, %v767
    %v773 = vmul.f32 %v309, %v708
    %v774 = vmul.f32 %v495, %v688
    %v776 = vrot.slane %v773, 2
    %v778 = vadd.f32 %v771, %v776
    %v780 = vrot.slane %v774, 1
    %v782 = vadd.f32 %v772, %v780
    %v783 = vmul.f32 %v316, %v695
    %v784 = vmul.f32 %v522, %v684
    %v786 = vrot.slane %v783, 2
    %v788 = vadd.f32 %v778, %v786
    %v790 = vrot.slane %v784, 2
    %v792 = vadd.f32 %v782, %v790
    %v793 = vmul.f32 %v323, %v699
    %v794 = vmul.f32 %v549, %v688
    %v796 = vrot.slane %v793, 2
    %v798 = vadd.f32 %v788, %v796
    %v800 = vrot.slane %v794, 2
    %v802 = vadd.f32 %v792, %v800
    %v803 = vmul.f32 %v333, %v714
    %v804 = vmul.f32 %v576, %v694
    %v806 = vrot.slane %v803, 3
    %v808 = vadd.f32 %v798, %v806
    %v809 = vadd.f32 %v802, %v804
    %v810 = vmul.f32 %v336, %v711
    %v811 = vmul.f32 %v603, %v691
    %v813 = vrot.slane %v810, 3
    %v815 = vadd.f32 %v808, %v813
    %v817 = vrot.slane %v811, 1
    %v819 = vadd.f32 %v809, %v817
    %v820 = vmul.f32 %v343, %v708
    %v821 = vmul.f32 %v630, %v688
    %v823 = vrot.slane %v820, 3
    %v825 = vadd.f32 %v815, %v823
    %v827 = vrot.slane %v821, 2
    %v829 = vadd.f32 %v819, %v827
    %v830 = vmul.f32 %v350, %v695
    %v831 = vmul.f32 %v657, %v684
    %v833 = vrot.slane %v830, 3
    %v835 = vadd.f32 %v825, %v833
    %v837 = vrot.slane %v831, 3
    %v839 = vadd.f32 %v829, %v837
    %v840 = vsub.f32 0.0, %v835
    %v841 = vmul.f32 %v250, 0.5
    %v842 = vmul.f32 %v841, %v839
    %v843 = vadd.f32 %v840, %v842
    %v844 = vmul.f32 %v360, %v695
    %v845 = vmul.f32 %v255, %v684
    %v846 = vmul.f32 %v363, %v699
    %v847 = vmul.f32 %v282, %v688
    %v848 = vadd.f32 %v844, %v846
    %v849 = vadd.f32 %v845, %v847
    %v850 = vmul.f32 %v370, %v702
    %v851 = vmul.f32 %v309, %v691
    %v852 = vadd.f32 %v848, %v850
    %v853 = vadd.f32 %v849, %v851
    %v854 = vmul.f32 %v377, %v705
    %v855 = vmul.f32 %v336, %v694
    %v856 = vadd.f32 %v852, %v854
    %v857 = vadd.f32 %v853, %v855
    %v858 = vmul.f32 %v387, %v708
    %v859 = vmul.f32 %v363, %v688
    %v861 = vrot.slane %v858, 1
    %v863 = vadd.f32 %v856, %v861
    %v864 = vadd.f32 %v857, %v859
    %v865 = vmul.f32 %v390, %v695
    %v866 = vmul.f32 %v390, %v684
    %v868 = vrot.slane %v865, 1
    %v870 = vadd.f32 %v863, %v868
    %v872 = vrot.slane %v866, 1
    %v874 = vadd.f32 %v864, %v872
    %v875 = vmul.f32 %v397, %v699
    %v876 = vmul.f32 %v417, %v688
    %v878 = vrot.slane %v875, 1
    %v880 = vadd.f32 %v870, %v878
    %v882 = vrot.slane %v876, 1
    %v884 = vadd.f32 %v874, %v882
    %v885 = vmul.f32 %v404, %v702
    %v886 = vmul.f32 %v444, %v691
    %v888 = vrot.slane %v885, 1
    %v890 = vadd.f32 %v880, %v888
    %v892 = vrot.slane %v886, 1
    %v894 = vadd.f32 %v884, %v892
    %v895 = vmul.f32 %v414, %v711
    %v896 = vmul.f32 %v471, %v691
    %v898 = vrot.slane %v895, 2
    %v900 = vadd.f32 %v890, %v898
    %v901 = vadd.f32 %v894, %v896
    %v902 = vmul.f32 %v417, %v708
    %v903 = vmul.f32 %v498, %v688
    %v905 = vrot.slane %v902, 2
    %v907 = vadd.f32 %v900, %v905
    %v909 = vrot.slane %v903, 1
    %v911 = vadd.f32 %v901, %v909
    %v912 = vmul.f32 %v424, %v695
    %v913 = vmul.f32 %v525, %v684
    %v915 = vrot.slane %v912, 2
    %v917 = vadd.f32 %v907, %v915
    %v919 = vrot.slane %v913, 2
    %v921 = vadd.f32 %v911, %v919
    %v922 = vmul.f32 %v431, %v699
    %v923 = vmul.f32 %v552, %v688
    %v925 = vrot.slane %v922, 2
    %v927 = vadd.f32 %v917, %v925
    %v929 = vrot.slane %v923, 2
    %v931 = vadd.f32 %v921, %v929
    %v932 = vmul.f32 %v441, %v714
    %v933 = vmul.f32 %v579, %v694
    %v935 = vrot.slane %v932, 3
    %v937 = vadd.f32 %v927, %v935
    %v938 = vadd.f32 %v931, %v933
    %v939 = vmul.f32 %v444, %v711
    %v940 = vmul.f32 %v606, %v691
    %v942 = vrot.slane %v939, 3
    %v944 = vadd.f32 %v937, %v942
    %v946 = vrot.slane %v940, 1
    %v948 = vadd.f32 %v938, %v946
    %v949 = vmul.f32 %v451, %v708
    %v950 = vmul.f32 %v633, %v688
    %v952 = vrot.slane %v949, 3
    %v954 = vadd.f32 %v944, %v952
    %v956 = vrot.slane %v950, 2
    %v958 = vadd.f32 %v948, %v956
    %v959 = vmul.f32 %v458, %v695
    %v960 = vmul.f32 %v660, %v684
    %v962 = vrot.slane %v959, 3
    %v964 = vadd.f32 %v954, %v962
    %v966 = vrot.slane %v960, 3
    %v968 = vadd.f32 %v958, %v966
    %v969 = vsub.f32 0.0, %v964
    %v971 = vrot.slane %v968, 7
    %v973 = vmul.f32 %v841, %v971
    %v975 = vrot.slane %v973, 1
    %v977 = vadd.f32 %v969, %v975
    %v978 = vmul.f32 %v468, %v695
    %v979 = vmul.f32 %v262, %v684
    %v980 = vmul.f32 %v471, %v699
    %v981 = vmul.f32 %v289, %v688
    %v982 = vadd.f32 %v978, %v980
    %v983 = vadd.f32 %v979, %v981
    %v984 = vmul.f32 %v478, %v702
    %v985 = vmul.f32 %v316, %v691
    %v986 = vadd.f32 %v982, %v984
    %v987 = vadd.f32 %v983, %v985
    %v988 = vmul.f32 %v485, %v705
    %v989 = vmul.f32 %v343, %v694
    %v990 = vadd.f32 %v986, %v988
    %v991 = vadd.f32 %v987, %v989
    %v992 = vmul.f32 %v495, %v708
    %v993 = vmul.f32 %v370, %v688
    %v995 = vrot.slane %v992, 1
    %v997 = vadd.f32 %v990, %v995
    %v998 = vadd.f32 %v991, %v993
    %v999 = vmul.f32 %v498, %v695
    %v1000 = vmul.f32 %v397, %v684
    %v1002 = vrot.slane %v999, 1
    %v1004 = vadd.f32 %v997, %v1002
    %v1006 = vrot.slane %v1000, 1
    %v1008 = vadd.f32 %v998, %v1006
    %v1009 = vmul.f32 %v505, %v699
    %v1010 = vmul.f32 %v424, %v688
    %v1012 = vrot.slane %v1009, 1
    %v1014 = vadd.f32 %v1004, %v1012
    %v1016 = vrot.slane %v1010, 1
    %v1018 = vadd.f32 %v1008, %v1016
    %v1019 = vmul.f32 %v512, %v702
    %v1020 = vmul.f32 %v451, %v691
    %v1022 = vrot.slane %v1019, 1
    %v1024 = vadd.f32 %v1014, %v1022
    %v1026 = vrot.slane %v1020, 1
    %v1028 = vadd.f32 %v1018, %v1026
    %v1029 = vmul.f32 %v522, %v711
    %v1030 = vmul.f32 %v478, %v691
    %v1032 = vrot.slane %v1029, 2
    %v1034 = vadd.f32 %v1024, %v1032
    %v1035 = vadd.f32 %v1028, %v1030
    %v1036 = vmul.f32 %v525, %v708
    %v1037 = vmul.f32 %v505, %v688
    %v1039 = vrot.slane %v1036, 2
    %v1041 = vadd.f32 %v1034, %v1039
    %v1043 = vrot.slane %v1037, 1
    %v1045 = vadd.f32 %v1035, %v1043
    %v1046 = vmul.f32 %v532, %v695
    %v1047 = vmul.f32 %v532, %v684
    %v1049 = vrot.slane %v1046, 2
    %v1051 = vadd.f32 %v1041, %v1049
    %v1053 = vrot.slane %v1047, 2
    %v1055 = vadd.f32 %v1045, %v1053
    %v1056 = vmul.f32 %v539, %v699
    %v1057 = vmul.f32 %v559, %v688
    %v1059 = vrot.slane %v1056, 2
    %v1061 = vadd.f32 %v1051, %v1059
    %v1063 = vrot.slane %v1057, 2
    %v1065 = vadd.f32 %v1055, %v1063
    %v1066 = vmul.f32 %v549, %v714
    %v1067 = vmul.f32 %v586, %v694
    %v1069 = vrot.slane %v1066, 3
    %v1071 = vadd.f32 %v1061, %v1069
    %v1072 = vadd.f32 %v1065, %v1067
    %v1073 = vmul.f32 %v552, %v711
    %v1074 = vmul.f32 %v613, %v691
    %v1076 = vrot.slane %v1073, 3
    %v1078 = vadd.f32 %v1071, %v1076
    %v1080 = vrot.slane %v1074, 1
    %v1082 = vadd.f32 %v1072, %v1080
    %v1083 = vmul.f32 %v559, %v708
    %v1084 = vmul.f32 %v640, %v688
    %v1086 = vrot.slane %v1083, 3
    %v1088 = vadd.f32 %v1078, %v1086
    %v1090 = vrot.slane %v1084, 2
    %v1092 = vadd.f32 %v1082, %v1090
    %v1093 = vmul.f32 %v566, %v695
    %v1094 = vmul.f32 %v667, %v684
    %v1096 = vrot.slane %v1093, 3
    %v1098 = vadd.f32 %v1088, %v1096
    %v1100 = vrot.slane %v1094, 3
    %v1102 = vadd.f32 %v1092, %v1100
    %v1103 = vsub.f32 0.0, %v1098
    %v1105 = vrot.slane %v1102, 6
    %v1107 = vmul.f32 %v841, %v1105
    %v1109 = vrot.slane %v1107, 2
    %v1111 = vadd.f32 %v1103, %v1109
    %v1112 = vmul.f32 %v576, %v695
    %v1113 = vmul.f32 %v269, %v684
    %v1114 = vmul.f32 %v579, %v699
    %v1115 = vmul.f32 %v296, %v688
    %v1116 = vadd.f32 %v1112, %v1114
    %v1117 = vadd.f32 %v1113, %v1115
    %v1118 = vmul.f32 %v586, %v702
    %v1119 = vmul.f32 %v323, %v691
    %v1120 = vadd.f32 %v1116, %v1118
    %v1121 = vadd.f32 %v1117, %v1119
    %v1122 = vmul.f32 %v593, %v705
    %v1123 = vmul.f32 %v350, %v694
    %v1124 = vadd.f32 %v1120, %v1122
    %v1125 = vadd.f32 %v1121, %v1123
    %v1126 = vmul.f32 %v603, %v708
    %v1127 = vmul.f32 %v377, %v688
    %v1129 = vrot.slane %v1126, 1
    %v1131 = vadd.f32 %v1124, %v1129
    %v1132 = vadd.f32 %v1125, %v1127
    %v1133 = vmul.f32 %v606, %v695
    %v1134 = vmul.f32 %v404, %v684
    %v1136 = vrot.slane %v1133, 1
    %v1138 = vadd.f32 %v1131, %v1136
    %v1140 = vrot.slane %v1134, 1
    %v1142 = vadd.f32 %v1132, %v1140
    %v1143 = vmul.f32 %v613, %v699
    %v1144 = vmul.f32 %v431, %v688
    %v1146 = vrot.slane %v1143, 1
    %v1148 = vadd.f32 %v1138, %v1146
    %v1150 = vrot.slane %v1144, 1
    %v1152 = vadd.f32 %v1142, %v1150
    %v1153 = vmul.f32 %v620, %v702
    %v1154 = vmul.f32 %v458, %v691
    %v1156 = vrot.slane %v1153, 1
    %v1158 = vadd.f32 %v1148, %v1156
    %v1160 = vrot.slane %v1154, 1
    %v1162 = vadd.f32 %v1152, %v1160
    %v1163 = vmul.f32 %v630, %v711
    %v1164 = vmul.f32 %v485, %v691
    %v1166 = vrot.slane %v1163, 2
    %v1168 = vadd.f32 %v1158, %v1166
    %v1169 = vadd.f32 %v1162, %v1164
    %v1170 = vmul.f32 %v633, %v708
    %v1171 = vmul.f32 %v512, %v688
    %v1173 = vrot.slane %v1170, 2
    %v1175 = vadd.f32 %v1168, %v1173
    %v1177 = vrot.slane %v1171, 1
    %v1179 = vadd.f32 %v1169, %v1177
    %v1180 = vmul.f32 %v640, %v695
    %v1181 = vmul.f32 %v539, %v684
    %v1183 = vrot.slane %v1180, 2
    %v1185 = vadd.f32 %v1175, %v1183
    %v1187 = vrot.slane %v1181, 2
    %v1189 = vadd.f32 %v1179, %v1187
    %v1190 = vmul.f32 %v647, %v699
    %v1191 = vmul.f32 %v566, %v688
    %v1193 = vrot.slane %v1190, 2
    %v1195 = vadd.f32 %v1185, %v1193
    %v1197 = vrot.slane %v1191, 2
    %v1199 = vadd.f32 %v1189, %v1197
    %v1200 = vmul.f32 %v657, %v714
    %v1201 = vmul.f32 %v593, %v694
    %v1203 = vrot.slane %v1200, 3
    %v1205 = vadd.f32 %v1195, %v1203
    %v1206 = vadd.f32 %v1199, %v1201
    %v1207 = vmul.f32 %v660, %v711
    %v1208 = vmul.f32 %v620, %v691
    %v1210 = vrot.slane %v1207, 3
    %v1212 = vadd.f32 %v1205, %v1210
    %v1214 = vrot.slane %v1208, 1
    %v1216 = vadd.f32 %v1206, %v1214
    %v1217 = vmul.f32 %v667, %v708
    %v1218 = vmul.f32 %v647, %v688
    %v1220 = vrot.slane %v1217, 3
    %v1222 = vadd.f32 %v1212, %v1220
    %v1224 = vrot.slane %v1218, 2
    %v1226 = vadd.f32 %v1216, %v1224
    %v1227 = vmul.f32 %v674, %v695
    %v1228 = vmul.f32 %v674, %v684
    %v1230 = vrot.slane %v1227, 3
    %v1232 = vadd.f32 %v1222, %v1230
    %v1234 = vrot.slane %v1228, 3
    %v1236 = vadd.f32 %v1226, %v1234
    %v1237 = vsub.f32 0.0, %v1232
    %v1239 = vrot.slane %v1236, 5
    %v1241 = vmul.f32 %v841, %v1239
    %v1243 = vrot.slane %v1241, 3
    %v1245 = vadd.f32 %v1237, %v1243
    %s1246 = sld [smem:[#allocation2 + $0x50]]
    %v1247 = vstv %s1246
    %v1248 = vmul.f32 %v1247, %v250
    %s1249 = sld [smem:[#allocation2 + $0x54]]
    %v1250 = vstv %s1249
    %v1251 = vmul.f32 %v1250, %v41
    %v1252 = vadd.f32 %v1248, %v1251
    %s1253 = sld [smem:[#allocation2 + $0x55]]
    %v1254 = vstv %s1253
    %v1255 = vmul.f32 %v1254, %v41
    %v1257 = vrot.slane %v1255, 1
    %v1259 = vadd.f32 %v1252, %v1257
    %s1260 = sld [smem:[#allocation2 + $0x56]]
    %v1261 = vstv %s1260
    %v1262 = vmul.f32 %v1261, %v41
    %v1264 = vrot.slane %v1262, 2
    %v1266 = vadd.f32 %v1259, %v1264
    %s1267 = sld [smem:[#allocation2 + $0x57]]
    %v1268 = vstv %s1267
    %v1269 = vmul.f32 %v1268, %v41
    %v1271 = vrot.slane %v1269, 3
    %v1273 = vadd.f32 %v1266, %v1271
    %s1274 = sld [smem:[#allocation2 + $0x51]]
    %v1275 = vstv %s1274
    %v1276 = vmul.f32 %v1275, %v250
    %s1277 = sld [smem:[#allocation2 + $0x58]]
    %v1278 = vstv %s1277
    %v1279 = vmul.f32 %v1278, %v41
    %v1281 = vrot.slane %v1279, 7
    %v1283 = vadd.f32 %v1276, %v1281
    %s1284 = sld [smem:[#allocation2 + $0x59]]
    %v1285 = vstv %s1284
    %v1286 = vmul.f32 %v1285, %v41
    %v1287 = vadd.f32 %v1283, %v1286
    %s1288 = sld [smem:[#allocation2 + $0x5a]]
    %v1289 = vstv %s1288
    %v1290 = vmul.f32 %v1289, %v41
    %v1292 = vrot.slane %v1290, 1
    %v1294 = vadd.f32 %v1287, %v1292
    %s1295 = sld [smem:[#allocation2 + $0x5b]]
    %v1296 = vstv %s1295
    %v1297 = vmul.f32 %v1296, %v41
    %v1299 = vrot.slane %v1297, 2
    %v1301 = vadd.f32 %v1294, %v1299
    %s1302 = sld [smem:[#allocation2 + $0x52]]
    %v1303 = vstv %s1302
    %v1304 = vmul.f32 %v1303, %v250
    %s1305 = sld [smem:[#allocation2 + $0x5c]]
    %v1306 = vstv %s1305
    %v1307 = vmul.f32 %v1306, %v41
    %v1309 = vrot.slane %v1307, 6
    %v1311 = vadd.f32 %v1304, %v1309
    %s1312 = sld [smem:[#allocation2 + $0x5d]]
    %v1313 = vstv %s1312
    %v1314 = vmul.f32 %v1313, %v41
    %v1316 = vrot.slane %v1314, 7
    %v1318 = vadd.f32 %v1311, %v1316
    %s1319 = sld [smem:[#allocation2 + $0x5e]]
    %v1320 = vstv %s1319
    %v1321 = vmul.f32 %v1320, %v41
    %v1322 = vadd.f32 %v1318, %v1321
    %s1323 = sld [smem:[#allocation2 + $0x5f]]
    %v1324 = vstv %s1323
    %v1325 = vmul.f32 %v1324, %v41
    %v1327 = vrot.slane %v1325, 1
    %v1329 = vadd.f32 %v1322, %v1327
    %s1330 = sld [smem:[#allocation2 + $0x53]]
    %v1331 = vstv %s1330
    %v1332 = vmul.f32 %v1331, %v250
    %s1333 = sld [smem:[#allocation2 + $0x60]]
    %v1334 = vstv %s1333
    %v1335 = vmul.f32 %v1334, %v41
    %v1337 = vrot.slane %v1335, 5
    %v1339 = vadd.f32 %v1332, %v1337
    %s1340 = sld [smem:[#allocation2 + $0x61]]
    %v1341 = vstv %s1340
    %v1342 = vmul.f32 %v1341, %v41
    %v1344 = vrot.slane %v1342, 6
    %v1346 = vadd.f32 %v1339, %v1344
    %s1347 = sld [smem:[#allocation2 + $0x62]]
    %v1348 = vstv %s1347
    %v1349 = vmul.f32 %v1348, %v41
    %v1351 = vrot.slane %v1349, 7
    %v1353 = vadd.f32 %v1346, %v1351
    %s1354 = sld [smem:[#allocation2 + $0x63]]
    %v1355 = vstv %s1354
    %v1356 = vmul.f32 %v1355, %v41
    %v1357 = vadd.f32 %v1353, %v1356
    %s1358 = sld [smem:[#allocation2 + $0x64]]
    %v1359 = vstv %s1358
    %v1360 = vmul.f32 %v1359, %v43
    %s1361 = sld [smem:[#allocation2 + $0x68]]
    %v1362 = vstv %s1361
    %v1363 = vmul.f32 %v1362, %v43
    %v1365 = vrot.slane %v1363, 1
    %v1367 = vadd.f32 %v1360, %v1365
    %s1368 = sld [smem:[#allocation2 + $0x6c]]
    %v1369 = vstv %s1368
    %v1370 = vmul.f32 %v1369, %v42
    %v1371 = vsub.f32 %v1367, %v1370
    %v1372 = vsub.f32 %v1371, %v843
    %v1373 = vsub.f32 %v1372, %v1273
    %s1374 = sld [smem:[#allocation2 + $0x65]]
    %v1375 = vstv %s1374
    %v1376 = vmul.f32 %v1375, %v43
    %s1377 = sld [smem:[#allocation2 + $0x69]]
    %v1378 = vstv %s1377
    %v1379 = vmul.f32 %v1378, %v43
    %v1381 = vrot.slane %v1379, 1
    %v1383 = vadd.f32 %v1376, %v1381
    %s1384 = sld [smem:[#allocation2 + $0x6d]]
    %v1385 = vstv %s1384
    %v1386 = vmul.f32 %v1385, %v42
    %v1388 = vrot.slane %v1386, 1
    %v1390 = vsub.f32 %v1383, %v1388
    %v1391 = vsub.f32 %v1390, %v977
    %v1393 = vrot.slane %v1301, 1
    %v1395 = vsub.f32 %v1391, %v1393
    %s1396 = sld [smem:[#allocation2 + $0x66]]
    %v1397 = vstv %s1396
    %v1398 = vmul.f32 %v1397, %v43
    %s1399 = sld [smem:[#allocation2 + $0x6a]]
    %v1400 = vstv %s1399
    %v1401 = vmul.f32 %v1400, %v43
    %v1403 = vrot.slane %v1401, 1
    %v1405 = vadd.f32 %v1398, %v1403
    %s1406 = sld [smem:[#allocation2 + $0x6e]]
    %v1407 = vstv %s1406
    %v1408 = vmul.f32 %v1407, %v42
    %v1410 = vrot.slane %v1408, 2
    %v1412 = vsub.f32 %v1405, %v1410
    %v1413 = vsub.f32 %v1412, %v1111
    %v1415 = vrot.slane %v1329, 2
    %v1417 = vsub.f32 %v1413, %v1415
    %s1418 = sld [smem:[#allocation2 + $0x67]]
    %v1419 = vstv %s1418
    %v1420 = vmul.f32 %v1419, %v43
    %s1421 = sld [smem:[#allocation2 + $0x6b]]
    %v1422 = vstv %s1421
    %v1423 = vmul.f32 %v1422, %v43
    %v1425 = vrot.slane %v1423, 1
    %v1427 = vadd.f32 %v1420, %v1425
    %s1428 = sld [smem:[#allocation2 + $0x6f]]
    %v1429 = vstv %s1428
    %v1430 = vmul.f32 %v1429, %v42
    %v1432 = vrot.slane %v1430, 3
    %v1434 = vsub.f32 %v1427, %v1432
    %v1435 = vsub.f32 %v1434, %v1245
    %v1437 = vrot.slane %v1357, 3
    %v1439 = vsub.f32 %v1435, %v1437
    %v1440 = vrcp.pop %v277
    %v1441 = vmul.f32 %v277, %v1440
    %v1442 = vsub.f32 2.0, %v1441
    %v1443 = vmul.f32 %v1440, %v1442
    %v1444 = vmul.f32 %v277, %v1443
    %v1445 = vsub.f32 2.0, %v1444
    %v1446 = vmul.f32 %v1443, %v1445
    %v1447 = vmul.f32 %v304, %v1446
    %v1448 = vmul.f32 %v331, %v1446
    %v1449 = vmul.f32 %v358, %v1446
    %v1450 = vmul.f32 %v1373, %v1446
    %v1451 = vmul.f32 %v385, %v1447
    %v1452 = vsub.f32 %v412, %v1451
    %v1453 = vmul.f32 %v385, %v1448
    %v1454 = vsub.f32 %v439, %v1453
    %v1455 = vmul.f32 %v385, %v1449
    %v1456 = vsub.f32 %v466, %v1455
    %v1457 = vmul.f32 %v385, %v1450
    %v1458 = vsub.f32 %v1395, %v1457
    %v1459 = vmul.f32 %v493, %v1447
    %v1460 = vsub.f32 %v520, %v1459
    %v1461 = vmul.f32 %v493, %v1448
    %v1462 = vsub.f32 %v547, %v1461
    %v1463 = vmul.f32 %v493, %v1449
    %v1464 = vsub.f32 %v574, %v1463
    %v1465 = vmul.f32 %v493, %v1450
    %v1466 = vsub.f32 %v1417, %v1465
    %v1467 = vmul.f32 %v601, %v1447
    %v1468 = vsub.f32 %v628, %v1467
    %v1469 = vmul.f32 %v601, %v1448
    %v1470 = vsub.f32 %v655, %v1469
    %v1471 = vmul.f32 %v601, %v1449
    %v1472 = vsub.f32 %v682, %v1471
    %v1473 = vmul.f32 %v601, %v1450
    %v1474 = vsub.f32 %v1439, %v1473
    %v1475 = vrcp.pop %v1452
    %v1476 = vmul.f32 %v1452, %v1475
    %v1477 = vsub.f32 2.0, %v1476
    %v1478 = vmul.f32 %v1475, %v1477
    %v1479 = vmul.f32 %v1452, %v1478
    %v1480 = vsub.f32 2.0, %v1479
    %v1481 = vmul.f32 %v1478, %v1480
    %v1482 = vmul.f32 %v1454, %v1481
    %v1483 = vmul.f32 %v1456, %v1481
    %v1484 = vmul.f32 %v1458, %v1481
    %v1485 = vmul.f32 %v1447, %v1482
    %v1486 = vsub.f32 %v1448, %v1485
    %v1487 = vmul.f32 %v1447, %v1483
    %v1488 = vsub.f32 %v1449, %v1487
    %v1489 = vmul.f32 %v1447, %v1484
    %v1490 = vsub.f32 %v1450, %v1489
    %v1491 = vmul.f32 %v1460, %v1482
    %v1492 = vsub.f32 %v1462, %v1491
    %v1493 = vmul.f32 %v1460, %v1483
    %v1494 = vsub.f32 %v1464, %v1493
    %v1495 = vmul.f32 %v1460, %v1484
    %v1496 = vsub.f32 %v1466, %v1495
    %v1497 = vmul.f32 %v1468, %v1482
    %v1498 = vsub.f32 %v1470, %v1497
    %v1499 = vmul.f32 %v1468, %v1483
    %v1500 = vsub.f32 %v1472, %v1499
    %v1501 = vmul.f32 %v1468, %v1484
    %v1502 = vsub.f32 %v1474, %v1501
    %v1503 = vrcp.pop %v1492
    %v1504 = vmul.f32 %v1492, %v1503
    %v1505 = vsub.f32 2.0, %v1504
    %v1506 = vmul.f32 %v1503, %v1505
    %v1507 = vmul.f32 %v1492, %v1506
    %v1508 = vsub.f32 2.0, %v1507
    %v1509 = vmul.f32 %v1506, %v1508
    %v1510 = vmul.f32 %v1494, %v1509
    %v1511 = vmul.f32 %v1496, %v1509
    %v1512 = vmul.f32 %v1486, %v1510
    %v1513 = vsub.f32 %v1488, %v1512
    %v1514 = vmul.f32 %v1486, %v1511
    %v1515 = vsub.f32 %v1490, %v1514
    %v1516 = vmul.f32 %v1482, %v1510
    %v1517 = vsub.f32 %v1483, %v1516
    %v1518 = vmul.f32 %v1482, %v1511
    %v1519 = vsub.f32 %v1484, %v1518
    %v1520 = vmul.f32 %v1498, %v1510
    %v1521 = vsub.f32 %v1500, %v1520
    %v1522 = vmul.f32 %v1498, %v1511
    %v1523 = vsub.f32 %v1502, %v1522
    %v1524 = vrcp.pop %v1521
    %v1525 = vmul.f32 %v1521, %v1524
    %v1526 = vsub.f32 2.0, %v1525
    %v1527 = vmul.f32 %v1524, %v1526
    %v1528 = vmul.f32 %v1521, %v1527
    %v1529 = vsub.f32 2.0, %v1528
    %v1530 = vmul.f32 %v1527, %v1529
    %v1531 = vmul.f32 %v1523, %v1530
    %v1532 = vmul.f32 %v1513, %v1531
    %v1533 = vsub.f32 %v1515, %v1532
    %v1534 = vmul.f32 %v1517, %v1531
    %v1535 = vsub.f32 %v1519, %v1534
    %v1536 = vmul.f32 %v1510, %v1531
    %v1537 = vsub.f32 %v1511, %v1536
    %1538 = vst [vmem:[#allocation7] sm:$0x1] %v1533
    %1539 = vst [vmem:[#allocation7 + $0x1] sm:$0x1] %v1535
    %1540 = vst [vmem:[#allocation7 + $0x2] sm:$0x1] %v1537
    %1541 = vst [vmem:[#allocation7 + $0x3] sm:$0x1] %v1531
    // Predicated region
    $region26: #{tpu_custom_call.1} parent=1 // pred_check
      _
    $region27: #{tpu_custom_call.1} parent=1 // pred_check_branch
      %1543 = sbr.rel (0) target = $region29
    $region28: #{tpu_custom_call.1} parent=1 // pred_region
      %s1545 = ssub.s32 64, 64
      %1546 = vsyncadd [#allocation4], %s1545
      %s1548 = sshll.u32 [#allocation7], 4
      %s1549 = int_to_ptr.vmem [resolvable:$true] %s1548
      %1551 = dma.vmem_to_hbm [thread:$0]  %s1549, 64, %s4, [#allocation4]
    $region29: #{tpu_custom_call.1} parent=1 // pred_fallthru
      _
    // Predicated region
    $region30: #{tpu_custom_call.1} parent=1 // pred_check
      _
    $region31: #{tpu_custom_call.1} parent=1 // pred_check_branch
      %1553 = sbr.rel (0) target = $region33
    $region32: #{tpu_custom_call.1} parent=1 // pred_region
      %1554 = dma.done [#allocation4], 64
    $region33: #{tpu_custom_call.1} parent=1 // pred_fallthru
      _
    %1555 = vsyncpa [#allocation3], 1
    %1556 = vsyncpa [#allocation4], 1
    %1557 = vsyncpa [#allocation5], 1

</llo_original>
